<compile_context>
chip_gen: v7x
topology: tpu7x:2x2x1
jax: 0.10.0
libtpu: 0.0.40
codegen_flags: <defaults>
</compile_context>

<pallas_src>
import functools

import jax
import jax.numpy as jnp
from jax.experimental import pallas as pl
from jax.experimental.pallas import tpu as pltpu


def _bias_elu_bf16(y_f32, b_bf16):
    """One f32->bf16 cast, then bias add + ELU(alpha=1) entirely in packed bf16.

    Negative branch uses exp(x) - 1 (instead of expm1); at bf16 output precision
    the difference is far below tolerance and the reference uses the same formula.
    """
    yb = y_f32.astype(jnp.bfloat16) + b_bf16
    return jnp.where(yb > 0, yb, jnp.exp(yb) - 1.0)


def merge_model_kernel(x_ref, w_stack_ref, b_stack_ref, wm_ref, bm_ref, o_ref):
    """One row-tile of lane-packed tokens through all stacked linears + merge.

    x_ref       : (tm, G*2d)               bf16  (G tokens packed per row)
    w_stack_ref : (3*n_layers, G*2d, G*2d) bf16  (block-diagonal, [in, out])
    b_stack_ref : (3*n_layers, 1, G*2d)    bf16
    wm_ref      : (G*2d, G*d)              bf16  (block-diagonal merge weight)
    bm_ref      : (1, G*d)                 bf16
    o_ref       : (tm, G*d)                bf16
    """
    h = x_ref[...]                                  # bf16 (tm, G*2d)
    n_lin = w_stack_ref.shape[0]                    # static: 3 * n_layers
    for l in range(n_lin):                          # unrolled (static trip count)
        y = jnp.dot(h, w_stack_ref[l], preferred_element_type=jnp.float32)
        h = _bias_elu_bf16(y, b_stack_ref[l])       # bf16 epilogue
    y = jnp.dot(h, wm_ref[...], preferred_element_type=jnp.float32)
    o_ref[...] = _bias_elu_bf16(y, bm_ref[...]).astype(o_ref.dtype)


def _round_up(x, n):
    return (x + n - 1) // n * n


def _device_kind():
    try:
        return jax.devices()[0].device_kind.lower()
    except Exception:
        return ""


def _is_small_mxu():
    # v2-v5 class chips have 128x128 MXUs; v6e/v7x have 256-wide MXUs.
    return any(v in _device_kind() for v in ("v2", "v3", "v4", "v5"))


def lane_group(n_dim):
    """Tokens packed per grouped row so that G*2*n_dim fills the MXU width."""
    d2 = 2 * n_dim
    target = 128 if _is_small_mxu() else 256
    if d2 > target or target % d2 != 0:
        return 1
    return target // d2


def default_tile_rows():
    """Default grouped-row tile: larger on v6e/v7x to amortize grid-step cost."""
    return 1024 if _is_small_mxu() else 2048


def pack_params(w_stack, b_stack, w_merge, b_merge, G):
    """Block-diagonal weight packing for G-token lane packing.

    Call ONCE at parameter-load time (hoisted out of the per-call path); the
    packed arrays are KiB-scale and reused by every forward call.
    """
    n_lin, d2, _ = w_stack.shape
    d = w_merge.shape[1]
    eye = jnp.eye(G, dtype=w_stack.dtype)
    w_bd = jnp.einsum("gh,lio->lgiho", eye, w_stack).reshape(n_lin, G * d2, G * d2)
    b_bd = jnp.tile(b_stack, (1, 1, G))                            # (n_lin, 1, G*2d)
    wm_bd = jnp.einsum("gh,io->giho", eye.astype(w_merge.dtype),
                       w_merge).reshape(G * d2, G * d)             # (G*2d, G*d)
    bm_bd = jnp.tile(b_merge, (1, G))                              # (1, G*d)
    return w_bd, b_bd, wm_bd, bm_bd


@functools.partial(jax.jit, static_argnames=("G", "tm"))
def merge_model_forward(x, w_bd, b_bd, wm_bd, bm_bd, *, G, tm):
    """x: (s0, s1, s2, s3, s4, d) bf16 -> (s0, s1, s2, s3, s4//2, d) bf16."""
    s0, s1, s2, s3, s4, d = x.shape
    assert s4 % 2 == 0
    d2 = 2 * d
    n_lin = w_bd.shape[0]
    gd2, gd = G * d2, G * d
    assert w_bd.shape == (n_lin, gd2, gd2)

    # equivalent of input.view(s0, s1, s2, s3, -1, 2*d), flattened to token rows.
    m = s0 * s1 * s2 * s3 * (s4 // 2)
    x_flat = x.reshape(m, d2)

    # Pad only up to a multiple of G (<= G-1 rows, and only when ragged).
    mg = pl.cdiv(m, G)
    m_pad = mg * G
    if m_pad > m:
        x_flat = jnp.pad(x_flat, ((0, m_pad - m), (0, 0)))
    xg = x_flat.reshape(mg, gd2)

    # Grouped-row tile.  Partial tail blocks are handled by the pipeline
    # (masked output writes); rows are independent and block-diagonal lanes
    # never mix, so garbage tail rows cannot contaminate real outputs.
    tm_req = max(16, _round_up(tm, 16))            # 16: bf16 sublane packing
    if mg > tm_req:
        tm_eff = tm_req
    elif mg >= 512:
        # Enough work to keep >= 2 grid steps (shards across v7x's two TCs).
        tm_eff = max(16, _round_up(pl.cdiv(mg, 2), 16))
    else:
        tm_eff = mg                                 # single exact-fit block
    grid = (pl.cdiv(mg, tm_eff),)

    out_g = pl.pallas_call(
        merge_model_kernel,
        out_shape=jax.ShapeDtypeStruct((mg, gd), jnp.bfloat16),
        grid_spec=pltpu.PrefetchScalarGridSpec(
            num_scalar_prefetch=0,
            grid=grid,
            in_specs=[
                pl.BlockSpec((tm_eff, gd2), lambda i: (i, 0)),
                # Weights/biases: constant index_map -> VMEM-resident.
                pl.BlockSpec((n_lin, gd2, gd2), lambda i: (0, 0, 0)),
                pl.BlockSpec((n_lin, 1, gd2), lambda i: (0, 0, 0)),
                pl.BlockSpec((gd2, gd), lambda i: (0, 0)),
                pl.BlockSpec((1, gd), lambda i: (0, 0)),
            ],
            out_specs=pl.BlockSpec((tm_eff, gd), lambda i: (i, 0)),
        ),
        compiler_params=pltpu.CompilerParams(
            dimension_semantics=("parallel",),     # row grid shards across TCs
            vmem_limit_bytes=32 * 1024 * 1024,
        ),
    )(xg, w_bd, b_bd, wm_bd, bm_bd)

    out_flat = out_g.reshape(m_pad, d)[:m]
    return out_flat.reshape(s0, s1, s2, s3, s4 // 2, d)


def init_params(key, n_dim, n_layers):
    """Deterministic synthetic parameters (shapes match the PyTorch module)."""
    d2 = 2 * n_dim
    n_lin = 3 * n_layers
    keys = jax.random.split(key, 4)
    scale = 1.0 / jnp.sqrt(jnp.float32(d2))
    # Stacked per-layer linears lin1/lin2/lin3, stored transposed as (in, out).
    w_stack = (jax.random.normal(keys[0], (n_lin, d2, d2), jnp.float32) * scale
               ).astype(jnp.bfloat16)
    b_stack = (jax.random.normal(keys[1], (n_lin, 1, d2), jnp.float32) * scale
               ).astype(jnp.bfloat16)
    # merge: Linear(2d -> d), transposed to (2d, d).
    w_merge = (jax.random.normal(keys[2], (d2, n_dim), jnp.float32) * scale
               ).astype(jnp.bfloat16)
    b_merge = (jax.random.normal(keys[3], (1, n_dim), jnp.float32) * scale
               ).astype(jnp.bfloat16)
    return w_stack, b_stack, w_merge, b_merge


def reference_forward(x, w_stack, b_stack, w_merge, b_merge):
    """Pure-JAX reference mirroring the PyTorch forward (unpacked weights)."""
    s0, s1, s2, s3, s4, d = x.shape
    h = x.reshape(s0, s1, s2, s3, s4 // 2, 2 * d)
    for l in range(w_stack.shape[0]):
        y = jnp.einsum("...i,io->...o", h, w_stack[l],
                       preferred_element_type=jnp.float32)
        h = _bias_elu_bf16(y, b_stack[l, 0])
    y = jnp.einsum("...i,io->...o", h, w_merge,
                   preferred_element_type=jnp.float32)
    return _bias_elu_bf16(y, b_merge[0])


def _check(out, x, params, tol=0.1, tag=""):
    ref = reference_forward(x, *params)
    err = float(jnp.max(jnp.abs(out.astype(jnp.float32) - ref.astype(jnp.float32))))
    assert err < tol, f"max abs err {err} ({tag})"


if __name__ == "__main__":
    n_dim = 16
    n_layers = 2
    key = jax.random.PRNGKey(0)
    k_x, k_p, k_x2, k_x3, k_x4 = jax.random.split(key, 5)
    params = init_params(k_p, n_dim, n_layers)

    G = lane_group(n_dim)
    tm = default_tile_rows()
    packed = pack_params(*params, G)      # block-diag packing done once

    # Case 1: nominal small shape.
    x = jax.random.normal(k_x, (2, 2, 2, 2, 4, n_dim), jnp.float32).astype(jnp.bfloat16)
    out = jax.block_until_ready(merge_model_forward(x, *packed, G=G, tm=tm))
    assert out.shape == (2, 2, 2, 2, 2, n_dim) and out.dtype == jnp.bfloat16
    _check(out, x, params, tag="nominal")

    # Case 2: row count that is not a tile multiple (single exact-fit block).
    x2 = jax.random.normal(k_x2, (2, 3, 2, 2, 4, n_dim), jnp.float32).astype(jnp.bfloat16)
    out2 = jax.block_until_ready(merge_model_forward(x2, *packed, G=G, tm=tm))
    assert out2.shape == (2, 3, 2, 2, 2, n_dim) and out2.dtype == jnp.bfloat16
    _check(out2, x2, params, tag="single-block")

    # Case 3: multi-step grid with a masked partial tail block (small tm=32).
    x3 = jax.random.normal(k_x3, (4, 2, 2, 2, 20, n_dim), jnp.float32).astype(jnp.bfloat16)
    out3 = jax.block_until_ready(merge_model_forward(x3, *packed, G=G, tm=32))
    assert out3.shape == (4, 2, 2, 2, 10, n_dim) and out3.dtype == jnp.bfloat16
    _check(out3, x3, params, tag="partial-tail")

    # Case 4: token count not a multiple of G (exercises the small G-pad path).
    x4 = jax.random.normal(k_x4, (1, 3, 1, 1, 2, n_dim), jnp.float32).astype(jnp.bfloat16)
    out4 = jax.block_until_ready(merge_model_forward(x4, *packed, G=G, tm=tm))
    assert out4.shape == (1, 3, 1, 1, 1, n_dim) and out4.dtype == jnp.bfloat16
    _check(out4, x4, params, tag="ragged-G")

    print("KERNEL_OK")
</pallas_src>

<mosaic_0001>
module attributes {stable_mosaic.version = 11 : i64} {
  func.func @merge_model_kernel(%arg0: i32, %arg1: memref<4x256xbf16, #tpu.memory_space<vmem>>, %arg2: memref<6x256x256xbf16, #tpu.memory_space<vmem>>, %arg3: memref<6x1x256xbf16, #tpu.memory_space<vmem>>, %arg4: memref<256x128xbf16, #tpu.memory_space<vmem>>, %arg5: memref<1x128xbf16, #tpu.memory_space<vmem>>, %arg6: memref<4x128xbf16, #tpu.memory_space<vmem>>) attributes {dimension_semantics = [#tpu.dimension_semantics<parallel>], iteration_bounds = array<i64: 1>, scalar_prefetch = 0 : i64, scratch_operands = 0 : i64, tpu.core_type = #tpu.core_type<tc>, window_params = [{transform_indices = @transform_0, window_bounds = array<i64: 4, 256>}, {pipeline_mode = #tpu.pipeline_mode<synchronous>, transform_indices = @transform_1, window_bounds = array<i64: 6, 256, 256>}, {pipeline_mode = #tpu.pipeline_mode<synchronous>, transform_indices = @transform_2, window_bounds = array<i64: 6, 1, 256>}, {pipeline_mode = #tpu.pipeline_mode<synchronous>, transform_indices = @transform_3, window_bounds = array<i64: 256, 128>}, {pipeline_mode = #tpu.pipeline_mode<synchronous>, transform_indices = @transform_4, window_bounds = array<i64: 1, 128>}, {transform_indices = @transform_5, window_bounds = array<i64: 4, 128>}]} {
    %c0 = arith.constant 0 : index
    %c0_0 = arith.constant 0 : index
    %0 = vector.load %arg1[%c0, %c0_0] : memref<4x256xbf16, #tpu.memory_space<vmem>>, vector<4x256xbf16>
    %c0_1 = arith.constant 0 : index
    %c0_2 = arith.constant 0 : index
    %c0_3 = arith.constant 0 : index
    %1 = vector.load %arg2[%c0_1, %c0_2, %c0_3] : memref<6x256x256xbf16, #tpu.memory_space<vmem>>, vector<1x256x256xbf16>
    %2 = vector.shape_cast %1 : vector<1x256x256xbf16> to vector<256x256xbf16>
    %cst = arith.constant dense<0.000000e+00> : vector<4x256xf32>
    %3 = tpu.matmul %0, %2, %cst {dimension_numbers = #tpu.dot_dimension_numbers<[1], [0], [0], [1], [0, 0, 1, 1], [], []>} : vector<4x256xbf16>, vector<256x256xbf16>, vector<4x256xf32> -> vector<4x256xf32>
    %c0_4 = arith.constant 0 : index
    %c0_5 = arith.constant 0 : index
    %c0_6 = arith.constant 0 : index
    %4 = vector.load %arg3[%c0_4, %c0_5, %c0_6] : memref<6x1x256xbf16, #tpu.memory_space<vmem>>, vector<1x1x256xbf16>
    %5 = vector.shape_cast %4 : vector<1x1x256xbf16> to vector<1x256xbf16>
    %6 = arith.truncf %3 : vector<4x256xf32> to vector<4x256xbf16>
    %7 = vector.broadcast %5 : vector<1x256xbf16> to vector<4x256xbf16>
    %8 = arith.addf %6, %7 : vector<4x256xbf16>
    %cst_7 = arith.constant 0.000000e+00 : bf16
    %9 = vector.broadcast %cst_7 : bf16 to vector<4x256xbf16>
    %10 = arith.cmpf ogt, %8, %9 : vector<4x256xbf16>
    %11 = math.exp %8 : vector<4x256xbf16>
    %cst_8 = arith.constant 1.000000e+00 : bf16
    %12 = vector.broadcast %cst_8 : bf16 to vector<4x256xbf16>
    %13 = arith.subf %11, %12 : vector<4x256xbf16>
    %14 = arith.select %10, %8, %13 : vector<4x256xi1>, vector<4x256xbf16>
    %c1 = arith.constant 1 : index
    %c0_9 = arith.constant 0 : index
    %c0_10 = arith.constant 0 : index
    %15 = vector.load %arg2[%c1, %c0_9, %c0_10] : memref<6x256x256xbf16, #tpu.memory_space<vmem>>, vector<1x256x256xbf16>
    %16 = vector.shape_cast %15 : vector<1x256x256xbf16> to vector<256x256xbf16>
    %cst_11 = arith.constant dense<0.000000e+00> : vector<4x256xf32>
    %17 = tpu.matmul %14, %16, %cst_11 {dimension_numbers = #tpu.dot_dimension_numbers<[1], [0], [0], [1], [0, 0, 1, 1], [], []>} : vector<4x256xbf16>, vector<256x256xbf16>, vector<4x256xf32> -> vector<4x256xf32>
    %c1_12 = arith.constant 1 : index
    %c0_13 = arith.constant 0 : index
    %c0_14 = arith.constant 0 : index
    %18 = vector.load %arg3[%c1_12, %c0_13, %c0_14] : memref<6x1x256xbf16, #tpu.memory_space<vmem>>, vector<1x1x256xbf16>
    %19 = vector.shape_cast %18 : vector<1x1x256xbf16> to vector<1x256xbf16>
    %20 = arith.truncf %17 : vector<4x256xf32> to vector<4x256xbf16>
    %21 = vector.broadcast %19 : vector<1x256xbf16> to vector<4x256xbf16>
    %22 = arith.addf %20, %21 : vector<4x256xbf16>
    %cst_15 = arith.constant 0.000000e+00 : bf16
    %23 = vector.broadcast %cst_15 : bf16 to vector<4x256xbf16>
    %24 = arith.cmpf ogt, %22, %23 : vector<4x256xbf16>
    %25 = math.exp %22 : vector<4x256xbf16>
    %cst_16 = arith.constant 1.000000e+00 : bf16
    %26 = vector.broadcast %cst_16 : bf16 to vector<4x256xbf16>
    %27 = arith.subf %25, %26 : vector<4x256xbf16>
    %28 = arith.select %24, %22, %27 : vector<4x256xi1>, vector<4x256xbf16>
    %c2 = arith.constant 2 : index
    %c0_17 = arith.constant 0 : index
    %c0_18 = arith.constant 0 : index
    %29 = vector.load %arg2[%c2, %c0_17, %c0_18] : memref<6x256x256xbf16, #tpu.memory_space<vmem>>, vector<1x256x256xbf16>
    %30 = vector.shape_cast %29 : vector<1x256x256xbf16> to vector<256x256xbf16>
    %cst_19 = arith.constant dense<0.000000e+00> : vector<4x256xf32>
    %31 = tpu.matmul %28, %30, %cst_19 {dimension_numbers = #tpu.dot_dimension_numbers<[1], [0], [0], [1], [0, 0, 1, 1], [], []>} : vector<4x256xbf16>, vector<256x256xbf16>, vector<4x256xf32> -> vector<4x256xf32>
    %c2_20 = arith.constant 2 : index
    %c0_21 = arith.constant 0 : index
    %c0_22 = arith.constant 0 : index
    %32 = vector.load %arg3[%c2_20, %c0_21, %c0_22] : memref<6x1x256xbf16, #tpu.memory_space<vmem>>, vector<1x1x256xbf16>
    %33 = vector.shape_cast %32 : vector<1x1x256xbf16> to vector<1x256xbf16>
    %34 = arith.truncf %31 : vector<4x256xf32> to vector<4x256xbf16>
    %35 = vector.broadcast %33 : vector<1x256xbf16> to vector<4x256xbf16>
    %36 = arith.addf %34, %35 : vector<4x256xbf16>
    %cst_23 = arith.constant 0.000000e+00 : bf16
    %37 = vector.broadcast %cst_23 : bf16 to vector<4x256xbf16>
    %38 = arith.cmpf ogt, %36, %37 : vector<4x256xbf16>
    %39 = math.exp %36 : vector<4x256xbf16>
    %cst_24 = arith.constant 1.000000e+00 : bf16
    %40 = vector.broadcast %cst_24 : bf16 to vector<4x256xbf16>
    %41 = arith.subf %39, %40 : vector<4x256xbf16>
    %42 = arith.select %38, %36, %41 : vector<4x256xi1>, vector<4x256xbf16>
    %c3 = arith.constant 3 : index
    %c0_25 = arith.constant 0 : index
    %c0_26 = arith.constant 0 : index
    %43 = vector.load %arg2[%c3, %c0_25, %c0_26] : memref<6x256x256xbf16, #tpu.memory_space<vmem>>, vector<1x256x256xbf16>
    %44 = vector.shape_cast %43 : vector<1x256x256xbf16> to vector<256x256xbf16>
    %cst_27 = arith.constant dense<0.000000e+00> : vector<4x256xf32>
    %45 = tpu.matmul %42, %44, %cst_27 {dimension_numbers = #tpu.dot_dimension_numbers<[1], [0], [0], [1], [0, 0, 1, 1], [], []>} : vector<4x256xbf16>, vector<256x256xbf16>, vector<4x256xf32> -> vector<4x256xf32>
    %c3_28 = arith.constant 3 : index
    %c0_29 = arith.constant 0 : index
    %c0_30 = arith.constant 0 : index
    %46 = vector.load %arg3[%c3_28, %c0_29, %c0_30] : memref<6x1x256xbf16, #tpu.memory_space<vmem>>, vector<1x1x256xbf16>
    %47 = vector.shape_cast %46 : vector<1x1x256xbf16> to vector<1x256xbf16>
    %48 = arith.truncf %45 : vector<4x256xf32> to vector<4x256xbf16>
    %49 = vector.broadcast %47 : vector<1x256xbf16> to vector<4x256xbf16>
    %50 = arith.addf %48, %49 : vector<4x256xbf16>
    %cst_31 = arith.constant 0.000000e+00 : bf16
    %51 = vector.broadcast %cst_31 : bf16 to vector<4x256xbf16>
    %52 = arith.cmpf ogt, %50, %51 : vector<4x256xbf16>
    %53 = math.exp %50 : vector<4x256xbf16>
    %cst_32 = arith.constant 1.000000e+00 : bf16
    %54 = vector.broadcast %cst_32 : bf16 to vector<4x256xbf16>
    %55 = arith.subf %53, %54 : vector<4x256xbf16>
    %56 = arith.select %52, %50, %55 : vector<4x256xi1>, vector<4x256xbf16>
    %c4 = arith.constant 4 : index
    %c0_33 = arith.constant 0 : index
    %c0_34 = arith.constant 0 : index
    %57 = vector.load %arg2[%c4, %c0_33, %c0_34] : memref<6x256x256xbf16, #tpu.memory_space<vmem>>, vector<1x256x256xbf16>
    %58 = vector.shape_cast %57 : vector<1x256x256xbf16> to vector<256x256xbf16>
    %cst_35 = arith.constant dense<0.000000e+00> : vector<4x256xf32>
    %59 = tpu.matmul %56, %58, %cst_35 {dimension_numbers = #tpu.dot_dimension_numbers<[1], [0], [0], [1], [0, 0, 1, 1], [], []>} : vector<4x256xbf16>, vector<256x256xbf16>, vector<4x256xf32> -> vector<4x256xf32>
    %c4_36 = arith.constant 4 : index
    %c0_37 = arith.constant 0 : index
    %c0_38 = arith.constant 0 : index
    %60 = vector.load %arg3[%c4_36, %c0_37, %c0_38] : memref<6x1x256xbf16, #tpu.memory_space<vmem>>, vector<1x1x256xbf16>
    %61 = vector.shape_cast %60 : vector<1x1x256xbf16> to vector<1x256xbf16>
    %62 = arith.truncf %59 : vector<4x256xf32> to vector<4x256xbf16>
    %63 = vector.broadcast %61 : vector<1x256xbf16> to vector<4x256xbf16>
    %64 = arith.addf %62, %63 : vector<4x256xbf16>
    %cst_39 = arith.constant 0.000000e+00 : bf16
    %65 = vector.broadcast %cst_39 : bf16 to vector<4x256xbf16>
    %66 = arith.cmpf ogt, %64, %65 : vector<4x256xbf16>
    %67 = math.exp %64 : vector<4x256xbf16>
    %cst_40 = arith.constant 1.000000e+00 : bf16
    %68 = vector.broadcast %cst_40 : bf16 to vector<4x256xbf16>
    %69 = arith.subf %67, %68 : vector<4x256xbf16>
    %70 = arith.select %66, %64, %69 : vector<4x256xi1>, vector<4x256xbf16>
    %c5 = arith.constant 5 : index
    %c0_41 = arith.constant 0 : index
    %c0_42 = arith.constant 0 : index
    %71 = vector.load %arg2[%c5, %c0_41, %c0_42] : memref<6x256x256xbf16, #tpu.memory_space<vmem>>, vector<1x256x256xbf16>
    %72 = vector.shape_cast %71 : vector<1x256x256xbf16> to vector<256x256xbf16>
    %cst_43 = arith.constant dense<0.000000e+00> : vector<4x256xf32>
    %73 = tpu.matmul %70, %72, %cst_43 {dimension_numbers = #tpu.dot_dimension_numbers<[1], [0], [0], [1], [0, 0, 1, 1], [], []>} : vector<4x256xbf16>, vector<256x256xbf16>, vector<4x256xf32> -> vector<4x256xf32>
    %c5_44 = arith.constant 5 : index
    %c0_45 = arith.constant 0 : index
    %c0_46 = arith.constant 0 : index
    %74 = vector.load %arg3[%c5_44, %c0_45, %c0_46] : memref<6x1x256xbf16, #tpu.memory_space<vmem>>, vector<1x1x256xbf16>
    %75 = vector.shape_cast %74 : vector<1x1x256xbf16> to vector<1x256xbf16>
    %76 = arith.truncf %73 : vector<4x256xf32> to vector<4x256xbf16>
    %77 = vector.broadcast %75 : vector<1x256xbf16> to vector<4x256xbf16>
    %78 = arith.addf %76, %77 : vector<4x256xbf16>
    %cst_47 = arith.constant 0.000000e+00 : bf16
    %79 = vector.broadcast %cst_47 : bf16 to vector<4x256xbf16>
    %80 = arith.cmpf ogt, %78, %79 : vector<4x256xbf16>
    %81 = math.exp %78 : vector<4x256xbf16>
    %cst_48 = arith.constant 1.000000e+00 : bf16
    %82 = vector.broadcast %cst_48 : bf16 to vector<4x256xbf16>
    %83 = arith.subf %81, %82 : vector<4x256xbf16>
    %84 = arith.select %80, %78, %83 : vector<4x256xi1>, vector<4x256xbf16>
    %c0_49 = arith.constant 0 : index
    %c0_50 = arith.constant 0 : index
    %85 = vector.load %arg4[%c0_49, %c0_50] : memref<256x128xbf16, #tpu.memory_space<vmem>>, vector<256x128xbf16>
    %cst_51 = arith.constant dense<0.000000e+00> : vector<4x128xf32>
    %86 = tpu.matmul %84, %85, %cst_51 {dimension_numbers = #tpu.dot_dimension_numbers<[1], [0], [0], [1], [0, 0, 1, 1], [], []>} : vector<4x256xbf16>, vector<256x128xbf16>, vector<4x128xf32> -> vector<4x128xf32>
    %c0_52 = arith.constant 0 : index
    %c0_53 = arith.constant 0 : index
    %87 = vector.load %arg5[%c0_52, %c0_53] : memref<1x128xbf16, #tpu.memory_space<vmem>>, vector<1x128xbf16>
    %88 = arith.truncf %86 : vector<4x128xf32> to vector<4x128xbf16>
    %89 = vector.broadcast %87 : vector<1x128xbf16> to vector<4x128xbf16>
    %90 = arith.addf %88, %89 : vector<4x128xbf16>
    %cst_54 = arith.constant 0.000000e+00 : bf16
    %91 = vector.broadcast %cst_54 : bf16 to vector<4x128xbf16>
    %92 = arith.cmpf ogt, %90, %91 : vector<4x128xbf16>
    %93 = math.exp %90 : vector<4x128xbf16>
    %cst_55 = arith.constant 1.000000e+00 : bf16
    %94 = vector.broadcast %cst_55 : bf16 to vector<4x128xbf16>
    %95 = arith.subf %93, %94 : vector<4x128xbf16>
    %96 = arith.select %92, %90, %95 : vector<4x128xi1>, vector<4x128xbf16>
    %c0_56 = arith.constant 0 : index
    %c0_57 = arith.constant 0 : index
    %97 = vector.load %arg6[%c0_56, %c0_57] : memref<4x128xbf16, #tpu.memory_space<vmem>>, vector<4x128xbf16>
    tpu.vector_store %arg6[%c0_56, %c0_57], %96 {strides = array<i32>} : memref<4x128xbf16, #tpu.memory_space<vmem>>, vector<4x128xbf16>,
    return
  }
  func.func @transform_0(%arg0: i32) -> (i32, i32) {
    %c0_i32 = arith.constant 0 : i32
    %c0_i32_0 = arith.constant 0 : i32
    return %arg0, %c0_i32 : i32, i32
  }
  func.func @transform_1(%arg0: i32) -> (i32, i32, i32) {
    %c0_i32 = arith.constant 0 : i32
    %c0_i32_0 = arith.constant 0 : i32
    %c0_i32_1 = arith.constant 0 : i32
    %c0_i32_2 = arith.constant 0 : i32
    return %c0_i32, %c0_i32_0, %c0_i32_1 : i32, i32, i32
  }
  func.func @transform_2(%arg0: i32) -> (i32, i32, i32) {
    %c0_i32 = arith.constant 0 : i32
    %c0_i32_0 = arith.constant 0 : i32
    %c0_i32_1 = arith.constant 0 : i32
    %c0_i32_2 = arith.constant 0 : i32
    return %c0_i32, %c0_i32_0, %c0_i32_1 : i32, i32, i32
  }
  func.func @transform_3(%arg0: i32) -> (i32, i32) {
    %c0_i32 = arith.constant 0 : i32
    %c0_i32_0 = arith.constant 0 : i32
    %c0_i32_1 = arith.constant 0 : i32
    return %c0_i32, %c0_i32_0 : i32, i32
  }
  func.func @transform_4(%arg0: i32) -> (i32, i32) {
    %c0_i32 = arith.constant 0 : i32
    %c0_i32_0 = arith.constant 0 : i32
    %c0_i32_1 = arith.constant 0 : i32
    return %c0_i32, %c0_i32_0 : i32, i32
  }
  func.func @transform_5(%arg0: i32) -> (i32, i32) {
    %c0_i32 = arith.constant 0 : i32
    %c0_i32_0 = arith.constant 0 : i32
    return %arg0, %c0_i32 : i32, i32
  }
}

</mosaic_0001>

<llo_original>
// kernel: merge_model_forward.1
$region0: #{merge_model_forward.1}
  #allocation0 [shape = 'u32[]', space=smem, size = 0x4, offset = 0x4, fixed_abs, tag = 'smem constant byte address 0x4 - core index']
  #allocation1 [shape = 'u32[144,128]{1,0:T(1,128)}', space=vmem, size = 0x12000, scoped, tag = 'internal scratch']
  %s0 = inlined_call_operand.vmem [shape: bf16[4,256], index: 0, kind: input, shape index: {}]
  %s1 = inlined_call_operand.hbm [shape: bf16[6,256,256], index: 1, kind: input, shape index: {}]
  %s2 = inlined_call_operand.vmem [shape: bf16[6,1,256], index: 2, kind: input, shape index: {}]
  %s3 = inlined_call_operand.hbm [shape: bf16[256,128], index: 3, kind: input, shape index: {}]
  %s4 = inlined_call_operand.vmem [shape: bf16[1,128], index: 4, kind: input, shape index: {}]
  %s5 = inlined_call_operand.vmem [shape: bf16[4,128], index: 5, kind: output, shape index: {}]
  %s6 = sld [smem:[#allocation0]]
  $region38: #{merge_model_forward.1} parent=0
    _
  %s8 = ssub.s32 1, %s6
  %s9 = scalar_select 0, %s8, %s6
  $region1: #{merge_model_forward.1} parent=0
    #allocation2 [shape = 'u8[786432]{0}', space=vmem, size = 0xc0000, scoped, tag = 'input window, operand 1, single buffered']
    #allocation3 [shape = 's32[1]{0}', space=sflag, size = 0x4, scoped, tag = 'scoped memory for merge_model_forward.1']
    #allocation4 [shape = 'u8[65536]{0}', space=vmem, size = 0x10000, scoped, tag = 'input window, operand 3, single buffered']
    #allocation5 [shape = 's32[1]{0}', space=sflag, size = 0x4, scoped, tag = 'scoped memory for merge_model_forward.1']
    %10 = vsyncpa [#allocation3], 0
    %11 = vsyncpa [#allocation5], 0
    // Predicated region
    $region2: #{merge_model_forward.1} parent=1 // pred_check
      _
    $region3: #{merge_model_forward.1} parent=1 // pred_check_branch
      %13 = sbr.rel (0) target = $region5
    $region4: #{merge_model_forward.1} parent=1 // pred_region
      _
    $region5: #{merge_model_forward.1} parent=1 // pred_fallthru
      _
    // Predicated region
    $region6: #{merge_model_forward.1} parent=1 // pred_check
      _
    $region7: #{merge_model_forward.1} parent=1 // pred_check_branch
      %15 = sbr.rel (0) target = $region9
    $region8: #{merge_model_forward.1} parent=1 // pred_region
      %s17 = ssub.s32 24576, 24576
      %18 = vsyncadd [#allocation3], %s17
      %s19 = sshll.u32 [#allocation2], 4
      %s20 = int_to_ptr.vmem [resolvable:$true] %s19
      %25 = dma.hbm_to_vmem [thread:$0]  %s1, 24576, %s20, [#allocation3], 128, 128, 8
    $region9: #{merge_model_forward.1} parent=1 // pred_fallthru
      _
    // Predicated region
    $region10: #{merge_model_forward.1} parent=1 // pred_check
      _
    $region11: #{merge_model_forward.1} parent=1 // pred_check_branch
      %27 = sbr.rel (0) target = $region13
    $region12: #{merge_model_forward.1} parent=1 // pred_region
      _
    $region13: #{merge_model_forward.1} parent=1 // pred_fallthru
      _
    // Predicated region
    $region14: #{merge_model_forward.1} parent=1 // pred_check
      _
    $region15: #{merge_model_forward.1} parent=1 // pred_check_branch
      %29 = sbr.rel (0) target = $region17
    $region16: #{merge_model_forward.1} parent=1 // pred_region
      %s31 = ssub.s32 2048, 2048
      %32 = vsyncadd [#allocation5], %s31
      %s33 = sshll.u32 [#allocation4], 4
      %s34 = int_to_ptr.vmem [resolvable:$true] %s33
      %39 = dma.hbm_to_vmem [thread:$0]  %s3, 2048, %s34, [#allocation5], 64, 64, 4
    $region17: #{merge_model_forward.1} parent=1 // pred_fallthru
      _
    // Predicated region
    $region18: #{merge_model_forward.1} parent=1 // pred_check
      _
    $region19: #{merge_model_forward.1} parent=1 // pred_check_branch
      %41 = sbr.rel (0) target = $region21
    $region20: #{merge_model_forward.1} parent=1 // pred_region
      _
    $region21: #{merge_model_forward.1} parent=1 // pred_fallthru
      _
    // Predicated region
    $region22: #{merge_model_forward.1} parent=1 // pred_check
      _
    $region23: #{merge_model_forward.1} parent=1 // pred_check_branch
      %43 = sbr.rel (0) target = $region25
    $region24: #{merge_model_forward.1} parent=1 // pred_region
      %44 = dma.done [#allocation3], 24576
    $region25: #{merge_model_forward.1} parent=1 // pred_fallthru
      _
    // Predicated region
    $region26: #{merge_model_forward.1} parent=1 // pred_check
      _
    $region27: #{merge_model_forward.1} parent=1 // pred_check_branch
      %46 = sbr.rel (0) target = $region29
    $region28: #{merge_model_forward.1} parent=1 // pred_region
      %47 = dma.done [#allocation5], 2048
    $region29: #{merge_model_forward.1} parent=1 // pred_fallthru
      _
    %v50 = vld [vmem:[%s0] sm:$0xf]
    %v51 = vld [vmem:[#allocation2] sm:$0xff]
    %v52 = vld [vmem:[#allocation2 + $0x8] sm:$0xff]
    %v53 = vld [vmem:[#allocation2 + $0x10] sm:$0xff]
    %v54 = vld [vmem:[#allocation2 + $0x18] sm:$0xff]
    %v55 = vld [vmem:[#allocation2 + $0x20] sm:$0xff]
    %v56 = vld [vmem:[#allocation2 + $0x28] sm:$0xff]
    %v57 = vld [vmem:[#allocation2 + $0x30] sm:$0xff]
    %v58 = vld [vmem:[#allocation2 + $0x38] sm:$0xff]
    %v59 = vld [vmem:[#allocation2 + $0x40] sm:$0xff]
    %v60 = vld [vmem:[#allocation2 + $0x48] sm:$0xff]
    %v61 = vld [vmem:[#allocation2 + $0x50] sm:$0xff]
    %v62 = vld [vmem:[#allocation2 + $0x58] sm:$0xff]
    %v63 = vld [vmem:[#allocation2 + $0x60] sm:$0xff]
    %v64 = vld [vmem:[#allocation2 + $0x68] sm:$0xff]
    %v65 = vld [vmem:[#allocation2 + $0x70] sm:$0xff]
    %v66 = vld [vmem:[#allocation2 + $0x78] sm:$0xff]
    %v67 = vld [vmem:[#allocation2 + $0x80] sm:$0xff]
    %v68 = vld [vmem:[#allocation2 + $0x88] sm:$0xff]
    %v69 = vld [vmem:[#allocation2 + $0x90] sm:$0xff]
    %v70 = vld [vmem:[#allocation2 + $0x98] sm:$0xff]
    %v71 = vld [vmem:[#allocation2 + $0xa0] sm:$0xff]
    %v72 = vld [vmem:[#allocation2 + $0xa8] sm:$0xff]
    %v73 = vld [vmem:[#allocation2 + $0xb0] sm:$0xff]
    %v74 = vld [vmem:[#allocation2 + $0xb8] sm:$0xff]
    %v75 = vld [vmem:[#allocation2 + $0xc0] sm:$0xff]
    %v76 = vld [vmem:[#allocation2 + $0xc8] sm:$0xff]
    %v77 = vld [vmem:[#allocation2 + $0xd0] sm:$0xff]
    %v78 = vld [vmem:[#allocation2 + $0xd8] sm:$0xff]
    %v79 = vld [vmem:[#allocation2 + $0xe0] sm:$0xff]
    %v80 = vld [vmem:[#allocation2 + $0xe8] sm:$0xff]
    %v81 = vld [vmem:[#allocation2 + $0xf0] sm:$0xff]
    %v82 = vld [vmem:[#allocation2 + $0xf8] sm:$0xff]
    %v85 = vunpack.c.l.s4 1983009808
    %v86 = vunpack.c.0.s8 %v85
    %v87 = vlaneseq
    %v88 = vshrl.u32 %v87, 7
    %v89 = vsub.s32 %v86, %v88
    %v90 = vrot.slane %v50, %v89
    %v91 = vcombine.high %v90, %v90
    %v126 = vunpack.c.l.b16 %v51
    %v127 = vunpack.c.h.b16 %v51
    %v128 = vunpack.c.l.b16 %v52
    %v129 = vunpack.c.h.b16 %v52
    %v130 = vunpack.c.l.b16 %v53
    %v131 = vunpack.c.h.b16 %v53
    %v132 = vunpack.c.l.b16 %v54
    %v133 = vunpack.c.h.b16 %v54
    %v134 = vunpack.c.l.b16 %v55
    %v135 = vunpack.c.h.b16 %v55
    %v136 = vunpack.c.l.b16 %v56
    %v137 = vunpack.c.h.b16 %v56
    %v138 = vunpack.c.l.b16 %v57
    %v139 = vunpack.c.h.b16 %v57
    %v140 = vunpack.c.l.b16 %v58
    %v141 = vunpack.c.h.b16 %v58
    %v142 = vunpack.c.l.b16 %v59
    %v143 = vunpack.c.h.b16 %v59
    %v144 = vunpack.c.l.b16 %v60
    %v145 = vunpack.c.h.b16 %v60
    %v146 = vunpack.c.l.b16 %v61
    %v147 = vunpack.c.h.b16 %v61
    %v148 = vunpack.c.l.b16 %v62
    %v149 = vunpack.c.h.b16 %v62
    %v150 = vunpack.c.l.b16 %v63
    %v151 = vunpack.c.h.b16 %v63
    %v152 = vunpack.c.l.b16 %v64
    %v153 = vunpack.c.h.b16 %v64
    %v154 = vunpack.c.l.b16 %v65
    %v155 = vunpack.c.h.b16 %v65
    %v156 = vunpack.c.l.b16 %v66
    %v157 = vunpack.c.h.b16 %v66
    %v158 = vunpack.c.l.b16 %v67
    %v159 = vunpack.c.h.b16 %v67
    %v160 = vunpack.c.l.b16 %v68
    %v161 = vunpack.c.h.b16 %v68
    %v162 = vunpack.c.l.b16 %v69
    %v163 = vunpack.c.h.b16 %v69
    %v164 = vunpack.c.l.b16 %v70
    %v165 = vunpack.c.h.b16 %v70
    %v166 = vunpack.c.l.b16 %v71
    %v167 = vunpack.c.h.b16 %v71
    %v168 = vunpack.c.l.b16 %v72
    %v169 = vunpack.c.h.b16 %v72
    %v170 = vunpack.c.l.b16 %v73
    %v171 = vunpack.c.h.b16 %v73
    %v172 = vunpack.c.l.b16 %v74
    %v173 = vunpack.c.h.b16 %v74
    %v174 = vunpack.c.l.b16 %v75
    %v175 = vunpack.c.h.b16 %v75
    %v176 = vunpack.c.l.b16 %v76
    %v177 = vunpack.c.h.b16 %v76
    %v178 = vunpack.c.l.b16 %v77
    %v179 = vunpack.c.h.b16 %v77
    %v180 = vunpack.c.l.b16 %v78
    %v181 = vunpack.c.h.b16 %v78
    %v182 = vunpack.c.l.b16 %v79
    %v183 = vunpack.c.h.b16 %v79
    %v184 = vunpack.c.l.b16 %v80
    %v185 = vunpack.c.h.b16 %v80
    %v186 = vunpack.c.l.b16 %v81
    %v187 = vunpack.c.h.b16 %v81
    %v188 = vunpack.c.l.b16 %v82
    %v189 = vunpack.c.h.b16 %v82
    %v190 = vpack.c.b16 %v128, %v126
    %v191 = vpack.c.b16 %v129, %v127
    %v192 = vpack.c.b16 %v132, %v130
    %v193 = vpack.c.b16 %v133, %v131
    %v194 = vpack.c.b16 %v136, %v134
    %v195 = vpack.c.b16 %v137, %v135
    %v196 = vpack.c.b16 %v140, %v138
    %v197 = vpack.c.b16 %v141, %v139
    %v198 = vpack.c.b16 %v144, %v142
    %v199 = vpack.c.b16 %v145, %v143
    %v200 = vpack.c.b16 %v148, %v146
    %v201 = vpack.c.b16 %v149, %v147
    %v202 = vpack.c.b16 %v152, %v150
    %v203 = vpack.c.b16 %v153, %v151
    %v204 = vpack.c.b16 %v156, %v154
    %v205 = vpack.c.b16 %v157, %v155
    %v206 = vpack.c.b16 %v160, %v158
    %v207 = vpack.c.b16 %v161, %v159
    %v208 = vpack.c.b16 %v164, %v162
    %v209 = vpack.c.b16 %v165, %v163
    %v210 = vpack.c.b16 %v168, %v166
    %v211 = vpack.c.b16 %v169, %v167
    %v212 = vpack.c.b16 %v172, %v170
    %v213 = vpack.c.b16 %v173, %v171
    %v214 = vpack.c.b16 %v176, %v174
    %v215 = vpack.c.b16 %v177, %v175
    %v216 = vpack.c.b16 %v180, %v178
    %v217 = vpack.c.b16 %v181, %v179
    %v218 = vpack.c.b16 %v184, %v182
    %v219 = vpack.c.b16 %v185, %v183
    %v220 = vpack.c.b16 %v188, %v186
    %v221 = vpack.c.b16 %v189, %v187
    %254 = vmatprep.subr.bf16.mxu0 %v191
    %255 = vmatpush1.bf16.msra.mxu0 %v190
    %256 = vmatprep.subr.bf16.mxu0 %v193
    %257 = vmatpush1.bf16.msra.mxu0 %v192
    %258 = vmatprep.subr.bf16.mxu0 %v195
    %259 = vmatpush1.bf16.msra.mxu0 %v194
    %260 = vmatprep.subr.bf16.mxu0 %v197
    %261 = vmatpush1.bf16.msra.mxu0 %v196
    %262 = vmatprep.subr.bf16.mxu0 %v199
    %263 = vmatpush1.bf16.msra.mxu0 %v198
    %264 = vmatprep.subr.bf16.mxu0 %v201
    %265 = vmatpush1.bf16.msra.mxu0 %v200
    %266 = vmatprep.subr.bf16.mxu0 %v203
    %267 = vmatpush1.bf16.msra.mxu0 %v202
    %268 = vmatprep.subr.bf16.mxu0 %v205
    %269 = vmatpush1.bf16.msra.mxu0 %v204
    %270 = vmatprep.subr.bf16.mxu0 %v207
    %271 = vmatpush1.bf16.msra.mxu0 %v206
    %272 = vmatprep.subr.bf16.mxu0 %v209
    %273 = vmatpush1.bf16.msra.mxu0 %v208
    %274 = vmatprep.subr.bf16.mxu0 %v211
    %275 = vmatpush1.bf16.msra.mxu0 %v210
    %276 = vmatprep.subr.bf16.mxu0 %v213
    %277 = vmatpush1.bf16.msra.mxu0 %v212
    %278 = vmatprep.subr.bf16.mxu0 %v215
    %279 = vmatpush1.bf16.msra.mxu0 %v214
    %280 = vmatprep.subr.bf16.mxu0 %v217
    %281 = vmatpush1.bf16.msra.mxu0 %v216
    %282 = vmatprep.subr.bf16.mxu0 %v219
    %283 = vmatpush1.bf16.msra.mxu0 %v218
    %284 = vmatprep.subr.bf16.mxu0 %v221
    %285 = vmatpush1.bf16.msra.mxu0 %v220
    %286 = vmatprep.mubr.bf16.mxu0 %v91
    %287 = vmatmul.mubr.bf16.gmra.mrb[0].mxu0 %v90
    %v288 = vpop.f32.mrb[0].mxu0
    %v289 = vadd.f32 0.0, %v288
    %v290 = vpop.f32.mrb[0].mxu0
    %v291 = vadd.f32 0.0, %v290
    %v292 = vpop.f32.mrb[0].mxu0
    %v293 = vpop.f32.mrb[0].mxu0
    %294 = vdwg.mxu0
    %v295 = vld [vmem:[%s2] sm:$0x3]
    %v296 = vpack.c.bf16 %v289, %v289
    %v297 = vpack.c.bf16 %v291, %v291
    %v300 = vunpack.c.l.s4 1966171168
    %v301 = vunpack.c.0.s8 %v300
    %v302 = vlaneseq
    %v303 = vshrl.u32 %v302, 7
    %v304 = vsub.s32 %v301, %v303
    %v305 = vrot.slane %v295, %v304
    %v306 = vcombine.high %v305, %v305
    %v308 = vunpack.c.l.s4 1966171168
    %v309 = vunpack.c.0.s8 %v308
    %v310 = vlaneseq
    %v311 = vshrl.u32 %v310, 7
    %v312 = vsub.s32 %v309, %v311
    %v313 = vrot.slane %v305, %v312
    %v315 = vunpack.c.l.s4 1966171168
    %v316 = vunpack.c.0.s8 %v315
    %v317 = vlaneseq
    %v318 = vshrl.u32 %v317, 7
    %v319 = vsub.s32 %v316, %v318
    %v320 = vrot.slane %v306, %v319
    %v322 = vpack.i.b16 %v313, %v313
    %v324 = vlaneseq
    %v325 = vshrl.u32 %v324, 7
    %v326 = vsub.s32 0, %v325
    %v327 = vrot.slane %v322, %v326
    %v329 = vpack.i.b16 %v320, %v320
    %v331 = vlaneseq
    %v332 = vshrl.u32 %v331, 7
    %v333 = vsub.s32 0, %v332
    %v334 = vrot.slane %v329, %v333
    %v335 = vadd.bf16 %v296, %v327
    %v336 = vadd.bf16 %v297, %v334
    %vm337 = vcmp.gt.bf16.partialorder %v335, 0
    %vm338 = vcmp.gt.bf16.partialorder %v336, 0
    %v340 = vmul.bf16 %v335, 1069105081
    %v341 = vpow.bf16.pop %v340
    %v343 = vmul.bf16 %v336, 1069105081
    %v344 = vpow.bf16.pop %v343
    %v345 = vsub.bf16 %v341, 1065369472
    %v346 = vsub.bf16 %v344, 1065369472
    %v347 = vsel %vm337, %v335, %v345
    %v348 = vsel %vm338, %v336, %v346
    %s349 = scalar_lea.vmem [#allocation2], 256
    %v350 = vld [vmem:[%s349] sm:$0xff]
    %v351 = vld [vmem:[%s349 + $0x8] sm:$0xff]
    %v352 = vld [vmem:[%s349 + $0x10] sm:$0xff]
    %v353 = vld [vmem:[%s349 + $0x18] sm:$0xff]
    %v354 = vld [vmem:[%s349 + $0x20] sm:$0xff]
    %v355 = vld [vmem:[%s349 + $0x28] sm:$0xff]
    %v356 = vld [vmem:[%s349 + $0x30] sm:$0xff]
    %v357 = vld [vmem:[%s349 + $0x38] sm:$0xff]
    %v358 = vld [vmem:[%s349 + $0x40] sm:$0xff]
    %v359 = vld [vmem:[%s349 + $0x48] sm:$0xff]
    %v360 = vld [vmem:[%s349 + $0x50] sm:$0xff]
    %v361 = vld [vmem:[%s349 + $0x58] sm:$0xff]
    %v362 = vld [vmem:[%s349 + $0x60] sm:$0xff]
    %v363 = vld [vmem:[%s349 + $0x68] sm:$0xff]
    %v364 = vld [vmem:[%s349 + $0x70] sm:$0xff]
    %v365 = vld [vmem:[%s349 + $0x78] sm:$0xff]
    %v366 = vld [vmem:[%s349 + $0x80] sm:$0xff]
    %v367 = vld [vmem:[%s349 + $0x88] sm:$0xff]
    %v368 = vld [vmem:[%s349 + $0x90] sm:$0xff]
    %v369 = vld [vmem:[%s349 + $0x98] sm:$0xff]
    %v370 = vld [vmem:[%s349 + $0xa0] sm:$0xff]
    %v371 = vld [vmem:[%s349 + $0xa8] sm:$0xff]
    %v372 = vld [vmem:[%s349 + $0xb0] sm:$0xff]
    %v373 = vld [vmem:[%s349 + $0xb8] sm:$0xff]
    %v374 = vld [vmem:[%s349 + $0xc0] sm:$0xff]
    %v375 = vld [vmem:[%s349 + $0xc8] sm:$0xff]
    %v376 = vld [vmem:[%s349 + $0xd0] sm:$0xff]
    %v377 = vld [vmem:[%s349 + $0xd8] sm:$0xff]
    %v378 = vld [vmem:[%s349 + $0xe0] sm:$0xff]
    %v379 = vld [vmem:[%s349 + $0xe8] sm:$0xff]
    %v380 = vld [vmem:[%s349 + $0xf0] sm:$0xff]
    %v381 = vld [vmem:[%s349 + $0xf8] sm:$0xff]
    %v414 = vunpack.c.l.b16 %v350
    %v415 = vunpack.c.h.b16 %v350
    %v416 = vunpack.c.l.b16 %v351
    %v417 = vunpack.c.h.b16 %v351
    %v418 = vunpack.c.l.b16 %v352
    %v419 = vunpack.c.h.b16 %v352
    %v420 = vunpack.c.l.b16 %v353
    %v421 = vunpack.c.h.b16 %v353
    %v422 = vunpack.c.l.b16 %v354
    %v423 = vunpack.c.h.b16 %v354
    %v424 = vunpack.c.l.b16 %v355
    %v425 = vunpack.c.h.b16 %v355
    %v426 = vunpack.c.l.b16 %v356
    %v427 = vunpack.c.h.b16 %v356
    %v428 = vunpack.c.l.b16 %v357
    %v429 = vunpack.c.h.b16 %v357
    %v430 = vunpack.c.l.b16 %v358
    %v431 = vunpack.c.h.b16 %v358
    %v432 = vunpack.c.l.b16 %v359
    %v433 = vunpack.c.h.b16 %v359
    %v434 = vunpack.c.l.b16 %v360
    %v435 = vunpack.c.h.b16 %v360
    %v436 = vunpack.c.l.b16 %v361
    %v437 = vunpack.c.h.b16 %v361
    %v438 = vunpack.c.l.b16 %v362
    %v439 = vunpack.c.h.b16 %v362
    %v440 = vunpack.c.l.b16 %v363
    %v441 = vunpack.c.h.b16 %v363
    %v442 = vunpack.c.l.b16 %v364
    %v443 = vunpack.c.h.b16 %v364
    %v444 = vunpack.c.l.b16 %v365
    %v445 = vunpack.c.h.b16 %v365
    %v446 = vunpack.c.l.b16 %v366
    %v447 = vunpack.c.h.b16 %v366
    %v448 = vunpack.c.l.b16 %v367
    %v449 = vunpack.c.h.b16 %v367
    %v450 = vunpack.c.l.b16 %v368
    %v451 = vunpack.c.h.b16 %v368
    %v452 = vunpack.c.l.b16 %v369
    %v453 = vunpack.c.h.b16 %v369
    %v454 = vunpack.c.l.b16 %v370
    %v455 = vunpack.c.h.b16 %v370
    %v456 = vunpack.c.l.b16 %v371
    %v457 = vunpack.c.h.b16 %v371
    %v458 = vunpack.c.l.b16 %v372
    %v459 = vunpack.c.h.b16 %v372
    %v460 = vunpack.c.l.b16 %v373
    %v461 = vunpack.c.h.b16 %v373
    %v462 = vunpack.c.l.b16 %v374
    %v463 = vunpack.c.h.b16 %v374
    %v464 = vunpack.c.l.b16 %v375
    %v465 = vunpack.c.h.b16 %v375
    %v466 = vunpack.c.l.b16 %v376
    %v467 = vunpack.c.h.b16 %v376
    %v468 = vunpack.c.l.b16 %v377
    %v469 = vunpack.c.h.b16 %v377
    %v470 = vunpack.c.l.b16 %v378
    %v471 = vunpack.c.h.b16 %v378
    %v472 = vunpack.c.l.b16 %v379
    %v473 = vunpack.c.h.b16 %v379
    %v474 = vunpack.c.l.b16 %v380
    %v475 = vunpack.c.h.b16 %v380
    %v476 = vunpack.c.l.b16 %v381
    %v477 = vunpack.c.h.b16 %v381
    %v478 = vpack.c.b16 %v416, %v414
    %v479 = vpack.c.b16 %v417, %v415
    %v480 = vpack.c.b16 %v420, %v418
    %v481 = vpack.c.b16 %v421, %v419
    %v482 = vpack.c.b16 %v424, %v422
    %v483 = vpack.c.b16 %v425, %v423
    %v484 = vpack.c.b16 %v428, %v426
    %v485 = vpack.c.b16 %v429, %v427
    %v486 = vpack.c.b16 %v432, %v430
    %v487 = vpack.c.b16 %v433, %v431
    %v488 = vpack.c.b16 %v436, %v434
    %v489 = vpack.c.b16 %v437, %v435
    %v490 = vpack.c.b16 %v440, %v438
    %v491 = vpack.c.b16 %v441, %v439
    %v492 = vpack.c.b16 %v444, %v442
    %v493 = vpack.c.b16 %v445, %v443
    %v494 = vpack.c.b16 %v448, %v446
    %v495 = vpack.c.b16 %v449, %v447
    %v496 = vpack.c.b16 %v452, %v450
    %v497 = vpack.c.b16 %v453, %v451
    %v498 = vpack.c.b16 %v456, %v454
    %v499 = vpack.c.b16 %v457, %v455
    %v500 = vpack.c.b16 %v460, %v458
    %v501 = vpack.c.b16 %v461, %v459
    %v502 = vpack.c.b16 %v464, %v462
    %v503 = vpack.c.b16 %v465, %v463
    %v504 = vpack.c.b16 %v468, %v466
    %v505 = vpack.c.b16 %v469, %v467
    %v506 = vpack.c.b16 %v472, %v470
    %v507 = vpack.c.b16 %v473, %v471
    %v508 = vpack.c.b16 %v476, %v474
    %v509 = vpack.c.b16 %v477, %v475
    %542 = vmatprep.subr.bf16.mxu0 %v479
    %543 = vmatpush1.bf16.msra.mxu0 %v478
    %544 = vmatprep.subr.bf16.mxu0 %v481
    %545 = vmatpush1.bf16.msra.mxu0 %v480
    %546 = vmatprep.subr.bf16.mxu0 %v483
    %547 = vmatpush1.bf16.msra.mxu0 %v482
    %548 = vmatprep.subr.bf16.mxu0 %v485
    %549 = vmatpush1.bf16.msra.mxu0 %v484
    %550 = vmatprep.subr.bf16.mxu0 %v487
    %551 = vmatpush1.bf16.msra.mxu0 %v486
    %552 = vmatprep.subr.bf16.mxu0 %v489
    %553 = vmatpush1.bf16.msra.mxu0 %v488
    %554 = vmatprep.subr.bf16.mxu0 %v491
    %555 = vmatpush1.bf16.msra.mxu0 %v490
    %556 = vmatprep.subr.bf16.mxu0 %v493
    %557 = vmatpush1.bf16.msra.mxu0 %v492
    %558 = vmatprep.subr.bf16.mxu0 %v495
    %559 = vmatpush1.bf16.msra.mxu0 %v494
    %560 = vmatprep.subr.bf16.mxu0 %v497
    %561 = vmatpush1.bf16.msra.mxu0 %v496
    %562 = vmatprep.subr.bf16.mxu0 %v499
    %563 = vmatpush1.bf16.msra.mxu0 %v498
    %564 = vmatprep.subr.bf16.mxu0 %v501
    %565 = vmatpush1.bf16.msra.mxu0 %v500
    %566 = vmatprep.subr.bf16.mxu0 %v503
    %567 = vmatpush1.bf16.msra.mxu0 %v502
    %568 = vmatprep.subr.bf16.mxu0 %v505
    %569 = vmatpush1.bf16.msra.mxu0 %v504
    %570 = vmatprep.subr.bf16.mxu0 %v507
    %571 = vmatpush1.bf16.msra.mxu0 %v506
    %572 = vmatprep.subr.bf16.mxu0 %v509
    %573 = vmatpush1.bf16.msra.mxu0 %v508
    %574 = vmatprep.mubr.bf16.mxu0 %v348
    %575 = vmatmul.mubr.bf16.gmra.mrb[0].mxu0 %v347
    %v576 = vpop.f32.mrb[0].mxu0
    %v577 = vadd.f32 0.0, %v576
    %v578 = vpop.f32.mrb[0].mxu0
    %v579 = vadd.f32 0.0, %v578
    %v580 = vpop.f32.mrb[0].mxu0
    %v581 = vpop.f32.mrb[0].mxu0
    %582 = vdwg.mxu0
    %s583 = scalar_lea.vmem %s2, 2
    %v584 = vld [vmem:[%s583] sm:$0x3]
    %v585 = vpack.c.bf16 %v577, %v577
    %v586 = vpack.c.bf16 %v579, %v579
    %v589 = vunpack.c.l.s4 1966171168
    %v590 = vunpack.c.0.s8 %v589
    %v591 = vlaneseq
    %v592 = vshrl.u32 %v591, 7
    %v593 = vsub.s32 %v590, %v592
    %v594 = vrot.slane %v584, %v593
    %v595 = vcombine.high %v594, %v594
    %v597 = vunpack.c.l.s4 1966171168
    %v598 = vunpack.c.0.s8 %v597
    %v599 = vlaneseq
    %v600 = vshrl.u32 %v599, 7
    %v601 = vsub.s32 %v598, %v600
    %v602 = vrot.slane %v594, %v601
    %v604 = vunpack.c.l.s4 1966171168
    %v605 = vunpack.c.0.s8 %v604
    %v606 = vlaneseq
    %v607 = vshrl.u32 %v606, 7
    %v608 = vsub.s32 %v605, %v607
    %v609 = vrot.slane %v595, %v608
    %v611 = vpack.i.b16 %v602, %v602
    %v613 = vlaneseq
    %v614 = vshrl.u32 %v613, 7
    %v615 = vsub.s32 0, %v614
    %v616 = vrot.slane %v611, %v615
    %v618 = vpack.i.b16 %v609, %v609
    %v620 = vlaneseq
    %v621 = vshrl.u32 %v620, 7
    %v622 = vsub.s32 0, %v621
    %v623 = vrot.slane %v618, %v622
    %v624 = vadd.bf16 %v585, %v616
    %v625 = vadd.bf16 %v586, %v623
    %vm626 = vcmp.gt.bf16.partialorder %v624, 0
    %vm627 = vcmp.gt.bf16.partialorder %v625, 0
    %v629 = vmul.bf16 %v624, 1069105081
    %v630 = vpow.bf16.pop %v629
    %v632 = vmul.bf16 %v625, 1069105081
    %v633 = vpow.bf16.pop %v632
    %v634 = vsub.bf16 %v630, 1065369472
    %v635 = vsub.bf16 %v633, 1065369472
    %v636 = vsel %vm626, %v624, %v634
    %v637 = vsel %vm627, %v625, %v635
    %s638 = scalar_lea.vmem [#allocation2], 512
    %v639 = vld [vmem:[%s638] sm:$0xff]
    %v640 = vld [vmem:[%s638 + $0x8] sm:$0xff]
    %v641 = vld [vmem:[%s638 + $0x10] sm:$0xff]
    %v642 = vld [vmem:[%s638 + $0x18] sm:$0xff]
    %v643 = vld [vmem:[%s638 + $0x20] sm:$0xff]
    %v644 = vld [vmem:[%s638 + $0x28] sm:$0xff]
    %v645 = vld [vmem:[%s638 + $0x30] sm:$0xff]
    %v646 = vld [vmem:[%s638 + $0x38] sm:$0xff]
    %v647 = vld [vmem:[%s638 + $0x40] sm:$0xff]
    %v648 = vld [vmem:[%s638 + $0x48] sm:$0xff]
    %v649 = vld [vmem:[%s638 + $0x50] sm:$0xff]
    %v650 = vld [vmem:[%s638 + $0x58] sm:$0xff]
    %v651 = vld [vmem:[%s638 + $0x60] sm:$0xff]
    %v652 = vld [vmem:[%s638 + $0x68] sm:$0xff]
    %v653 = vld [vmem:[%s638 + $0x70] sm:$0xff]
    %v654 = vld [vmem:[%s638 + $0x78] sm:$0xff]
    %v655 = vld [vmem:[%s638 + $0x80] sm:$0xff]
    %v656 = vld [vmem:[%s638 + $0x88] sm:$0xff]
    %v657 = vld [vmem:[%s638 + $0x90] sm:$0xff]
    %v658 = vld [vmem:[%s638 + $0x98] sm:$0xff]
    %v659 = vld [vmem:[%s638 + $0xa0] sm:$0xff]
    %v660 = vld [vmem:[%s638 + $0xa8] sm:$0xff]
    %v661 = vld [vmem:[%s638 + $0xb0] sm:$0xff]
    %v662 = vld [vmem:[%s638 + $0xb8] sm:$0xff]
    %v663 = vld [vmem:[%s638 + $0xc0] sm:$0xff]
    %v664 = vld [vmem:[%s638 + $0xc8] sm:$0xff]
    %v665 = vld [vmem:[%s638 + $0xd0] sm:$0xff]
    %v666 = vld [vmem:[%s638 + $0xd8] sm:$0xff]
    %v667 = vld [vmem:[%s638 + $0xe0] sm:$0xff]
    %v668 = vld [vmem:[%s638 + $0xe8] sm:$0xff]
    %v669 = vld [vmem:[%s638 + $0xf0] sm:$0xff]
    %v670 = vld [vmem:[%s638 + $0xf8] sm:$0xff]
    %v703 = vunpack.c.l.b16 %v639
    %v704 = vunpack.c.h.b16 %v639
    %v705 = vunpack.c.l.b16 %v640
    %v706 = vunpack.c.h.b16 %v640
    %v707 = vunpack.c.l.b16 %v641
    %v708 = vunpack.c.h.b16 %v641
    %v709 = vunpack.c.l.b16 %v642
    %v710 = vunpack.c.h.b16 %v642
    %v711 = vunpack.c.l.b16 %v643
    %v712 = vunpack.c.h.b16 %v643
    %v713 = vunpack.c.l.b16 %v644
    %v714 = vunpack.c.h.b16 %v644
    %v715 = vunpack.c.l.b16 %v645
    %v716 = vunpack.c.h.b16 %v645
    %v717 = vunpack.c.l.b16 %v646
    %v718 = vunpack.c.h.b16 %v646
    %v719 = vunpack.c.l.b16 %v647
    %v720 = vunpack.c.h.b16 %v647
    %v721 = vunpack.c.l.b16 %v648
    %v722 = vunpack.c.h.b16 %v648
    %v723 = vunpack.c.l.b16 %v649
    %v724 = vunpack.c.h.b16 %v649
    %v725 = vunpack.c.l.b16 %v650
    %v726 = vunpack.c.h.b16 %v650
    %v727 = vunpack.c.l.b16 %v651
    %v728 = vunpack.c.h.b16 %v651
    %v729 = vunpack.c.l.b16 %v652
    %v730 = vunpack.c.h.b16 %v652
    %v731 = vunpack.c.l.b16 %v653
    %v732 = vunpack.c.h.b16 %v653
    %v733 = vunpack.c.l.b16 %v654
    %v734 = vunpack.c.h.b16 %v654
    %v735 = vunpack.c.l.b16 %v655
    %v736 = vunpack.c.h.b16 %v655
    %v737 = vunpack.c.l.b16 %v656
    %v738 = vunpack.c.h.b16 %v656
    %v739 = vunpack.c.l.b16 %v657
    %v740 = vunpack.c.h.b16 %v657
    %v741 = vunpack.c.l.b16 %v658
    %v742 = vunpack.c.h.b16 %v658
    %v743 = vunpack.c.l.b16 %v659
    %v744 = vunpack.c.h.b16 %v659
    %v745 = vunpack.c.l.b16 %v660
    %v746 = vunpack.c.h.b16 %v660
    %v747 = vunpack.c.l.b16 %v661
    %v748 = vunpack.c.h.b16 %v661
    %v749 = vunpack.c.l.b16 %v662
    %v750 = vunpack.c.h.b16 %v662
    %v751 = vunpack.c.l.b16 %v663
    %v752 = vunpack.c.h.b16 %v663
    %v753 = vunpack.c.l.b16 %v664
    %v754 = vunpack.c.h.b16 %v664
    %v755 = vunpack.c.l.b16 %v665
    %v756 = vunpack.c.h.b16 %v665
    %v757 = vunpack.c.l.b16 %v666
    %v758 = vunpack.c.h.b16 %v666
    %v759 = vunpack.c.l.b16 %v667
    %v760 = vunpack.c.h.b16 %v667
    %v761 = vunpack.c.l.b16 %v668
    %v762 = vunpack.c.h.b16 %v668
    %v763 = vunpack.c.l.b16 %v669
    %v764 = vunpack.c.h.b16 %v669
    %v765 = vunpack.c.l.b16 %v670
    %v766 = vunpack.c.h.b16 %v670
    %v767 = vpack.c.b16 %v705, %v703
    %v768 = vpack.c.b16 %v706, %v704
    %v769 = vpack.c.b16 %v709, %v707
    %v770 = vpack.c.b16 %v710, %v708
    %v771 = vpack.c.b16 %v713, %v711
    %v772 = vpack.c.b16 %v714, %v712
    %v773 = vpack.c.b16 %v717, %v715
    %v774 = vpack.c.b16 %v718, %v716
    %v775 = vpack.c.b16 %v721, %v719
    %v776 = vpack.c.b16 %v722, %v720
    %v777 = vpack.c.b16 %v725, %v723
    %v778 = vpack.c.b16 %v726, %v724
    %v779 = vpack.c.b16 %v729, %v727
    %v780 = vpack.c.b16 %v730, %v728
    %v781 = vpack.c.b16 %v733, %v731
    %v782 = vpack.c.b16 %v734, %v732
    %v783 = vpack.c.b16 %v737, %v735
    %v784 = vpack.c.b16 %v738, %v736
    %v785 = vpack.c.b16 %v741, %v739
    %v786 = vpack.c.b16 %v742, %v740
    %v787 = vpack.c.b16 %v745, %v743
    %v788 = vpack.c.b16 %v746, %v744
    %v789 = vpack.c.b16 %v749, %v747
    %v790 = vpack.c.b16 %v750, %v748
    %v791 = vpack.c.b16 %v753, %v751
    %v792 = vpack.c.b16 %v754, %v752
    %v793 = vpack.c.b16 %v757, %v755
    %v794 = vpack.c.b16 %v758, %v756
    %v795 = vpack.c.b16 %v761, %v759
    %v796 = vpack.c.b16 %v762, %v760
    %v797 = vpack.c.b16 %v765, %v763
    %v798 = vpack.c.b16 %v766, %v764
    %831 = vmatprep.subr.bf16.mxu0 %v768
    %832 = vmatpush1.bf16.msra.mxu0 %v767
    %833 = vmatprep.subr.bf16.mxu0 %v770
    %834 = vmatpush1.bf16.msra.mxu0 %v769
    %835 = vmatprep.subr.bf16.mxu0 %v772
    %836 = vmatpush1.bf16.msra.mxu0 %v771
    %837 = vmatprep.subr.bf16.mxu0 %v774
    %838 = vmatpush1.bf16.msra.mxu0 %v773
    %839 = vmatprep.subr.bf16.mxu0 %v776
    %840 = vmatpush1.bf16.msra.mxu0 %v775
    %841 = vmatprep.subr.bf16.mxu0 %v778
    %842 = vmatpush1.bf16.msra.mxu0 %v777
    %843 = vmatprep.subr.bf16.mxu0 %v780
    %844 = vmatpush1.bf16.msra.mxu0 %v779
    %845 = vmatprep.subr.bf16.mxu0 %v782
    %846 = vmatpush1.bf16.msra.mxu0 %v781
    %847 = vmatprep.subr.bf16.mxu0 %v784
    %848 = vmatpush1.bf16.msra.mxu0 %v783
    %849 = vmatprep.subr.bf16.mxu0 %v786
    %850 = vmatpush1.bf16.msra.mxu0 %v785
    %851 = vmatprep.subr.bf16.mxu0 %v788
    %852 = vmatpush1.bf16.msra.mxu0 %v787
    %853 = vmatprep.subr.bf16.mxu0 %v790
    %854 = vmatpush1.bf16.msra.mxu0 %v789
    %855 = vmatprep.subr.bf16.mxu0 %v792
    %856 = vmatpush1.bf16.msra.mxu0 %v791
    %857 = vmatprep.subr.bf16.mxu0 %v794
    %858 = vmatpush1.bf16.msra.mxu0 %v793
    %859 = vmatprep.subr.bf16.mxu0 %v796
    %860 = vmatpush1.bf16.msra.mxu0 %v795
    %861 = vmatprep.subr.bf16.mxu0 %v798
    %862 = vmatpush1.bf16.msra.mxu0 %v797
    %863 = vmatprep.mubr.bf16.mxu0 %v637
    %864 = vmatmul.mubr.bf16.gmra.mrb[0].mxu0 %v636
    %v865 = vpop.f32.mrb[0].mxu0
    %v866 = vadd.f32 0.0, %v865
    %v867 = vpop.f32.mrb[0].mxu0
    %v868 = vadd.f32 0.0, %v867
    %v869 = vpop.f32.mrb[0].mxu0
    %v870 = vpop.f32.mrb[0].mxu0
    %871 = vdwg.mxu0
    %s872 = scalar_lea.vmem %s2, 4
    %v873 = vld [vmem:[%s872] sm:$0x3]
    %v874 = vpack.c.bf16 %v866, %v866
    %v875 = vpack.c.bf16 %v868, %v868
    %v878 = vunpack.c.l.s4 1966171168
    %v879 = vunpack.c.0.s8 %v878
    %v880 = vlaneseq
    %v881 = vshrl.u32 %v880, 7
    %v882 = vsub.s32 %v879, %v881
    %v883 = vrot.slane %v873, %v882
    %v884 = vcombine.high %v883, %v883
    %v886 = vunpack.c.l.s4 1966171168
    %v887 = vunpack.c.0.s8 %v886
    %v888 = vlaneseq
    %v889 = vshrl.u32 %v888, 7
    %v890 = vsub.s32 %v887, %v889
    %v891 = vrot.slane %v883, %v890
    %v893 = vunpack.c.l.s4 1966171168
    %v894 = vunpack.c.0.s8 %v893
    %v895 = vlaneseq
    %v896 = vshrl.u32 %v895, 7
    %v897 = vsub.s32 %v894, %v896
    %v898 = vrot.slane %v884, %v897
    %v900 = vpack.i.b16 %v891, %v891
    %v902 = vlaneseq
    %v903 = vshrl.u32 %v902, 7
    %v904 = vsub.s32 0, %v903
    %v905 = vrot.slane %v900, %v904
    %v907 = vpack.i.b16 %v898, %v898
    %v909 = vlaneseq
    %v910 = vshrl.u32 %v909, 7
    %v911 = vsub.s32 0, %v910
    %v912 = vrot.slane %v907, %v911
    %v913 = vadd.bf16 %v874, %v905
    %v914 = vadd.bf16 %v875, %v912
    %vm915 = vcmp.gt.bf16.partialorder %v913, 0
    %vm916 = vcmp.gt.bf16.partialorder %v914, 0
    %v918 = vmul.bf16 %v913, 1069105081
    %v919 = vpow.bf16.pop %v918
    %v921 = vmul.bf16 %v914, 1069105081
    %v922 = vpow.bf16.pop %v921
    %v923 = vsub.bf16 %v919, 1065369472
    %v924 = vsub.bf16 %v922, 1065369472
    %v925 = vsel %vm915, %v913, %v923
    %v926 = vsel %vm916, %v914, %v924
    %s927 = scalar_lea.vmem [#allocation2], 768
    %v928 = vld [vmem:[%s927] sm:$0xff]
    %v929 = vld [vmem:[%s927 + $0x8] sm:$0xff]
    %v930 = vld [vmem:[%s927 + $0x10] sm:$0xff]
    %v931 = vld [vmem:[%s927 + $0x18] sm:$0xff]
    %v932 = vld [vmem:[%s927 + $0x20] sm:$0xff]
    %v933 = vld [vmem:[%s927 + $0x28] sm:$0xff]
    %v934 = vld [vmem:[%s927 + $0x30] sm:$0xff]
    %v935 = vld [vmem:[%s927 + $0x38] sm:$0xff]
    %v936 = vld [vmem:[%s927 + $0x40] sm:$0xff]
    %v937 = vld [vmem:[%s927 + $0x48] sm:$0xff]
    %v938 = vld [vmem:[%s927 + $0x50] sm:$0xff]
    %v939 = vld [vmem:[%s927 + $0x58] sm:$0xff]
    %v940 = vld [vmem:[%s927 + $0x60] sm:$0xff]
    %v941 = vld [vmem:[%s927 + $0x68] sm:$0xff]
    %v942 = vld [vmem:[%s927 + $0x70] sm:$0xff]
    %v943 = vld [vmem:[%s927 + $0x78] sm:$0xff]
    %v944 = vld [vmem:[%s927 + $0x80] sm:$0xff]
    %v945 = vld [vmem:[%s927 + $0x88] sm:$0xff]
    %v946 = vld [vmem:[%s927 + $0x90] sm:$0xff]
    %v947 = vld [vmem:[%s927 + $0x98] sm:$0xff]
    %v948 = vld [vmem:[%s927 + $0xa0] sm:$0xff]
    %v949 = vld [vmem:[%s927 + $0xa8] sm:$0xff]
    %v950 = vld [vmem:[%s927 + $0xb0] sm:$0xff]
    %v951 = vld [vmem:[%s927 + $0xb8] sm:$0xff]
    %v952 = vld [vmem:[%s927 + $0xc0] sm:$0xff]
    %v953 = vld [vmem:[%s927 + $0xc8] sm:$0xff]
    %v954 = vld [vmem:[%s927 + $0xd0] sm:$0xff]
    %v955 = vld [vmem:[%s927 + $0xd8] sm:$0xff]
    %v956 = vld [vmem:[%s927 + $0xe0] sm:$0xff]
    %v957 = vld [vmem:[%s927 + $0xe8] sm:$0xff]
    %v958 = vld [vmem:[%s927 + $0xf0] sm:$0xff]
    %v959 = vld [vmem:[%s927 + $0xf8] sm:$0xff]
    %v992 = vunpack.c.l.b16 %v928
    %v993 = vunpack.c.h.b16 %v928
    %v994 = vunpack.c.l.b16 %v929
    %v995 = vunpack.c.h.b16 %v929
    %v996 = vunpack.c.l.b16 %v930
    %v997 = vunpack.c.h.b16 %v930
    %v998 = vunpack.c.l.b16 %v931
    %v999 = vunpack.c.h.b16 %v931
    %v1000 = vunpack.c.l.b16 %v932
    %v1001 = vunpack.c.h.b16 %v932
    %v1002 = vunpack.c.l.b16 %v933
    %v1003 = vunpack.c.h.b16 %v933
    %v1004 = vunpack.c.l.b16 %v934
    %v1005 = vunpack.c.h.b16 %v934
    %v1006 = vunpack.c.l.b16 %v935
    %v1007 = vunpack.c.h.b16 %v935
    %v1008 = vunpack.c.l.b16 %v936
    %v1009 = vunpack.c.h.b16 %v936
    %v1010 = vunpack.c.l.b16 %v937
    %v1011 = vunpack.c.h.b16 %v937
    %v1012 = vunpack.c.l.b16 %v938
    %v1013 = vunpack.c.h.b16 %v938
    %v1014 = vunpack.c.l.b16 %v939
    %v1015 = vunpack.c.h.b16 %v939
    %v1016 = vunpack.c.l.b16 %v940
    %v1017 = vunpack.c.h.b16 %v940
    %v1018 = vunpack.c.l.b16 %v941
    %v1019 = vunpack.c.h.b16 %v941
    %v1020 = vunpack.c.l.b16 %v942
    %v1021 = vunpack.c.h.b16 %v942
    %v1022 = vunpack.c.l.b16 %v943
    %v1023 = vunpack.c.h.b16 %v943
    %v1024 = vunpack.c.l.b16 %v944
    %v1025 = vunpack.c.h.b16 %v944
    %v1026 = vunpack.c.l.b16 %v945
    %v1027 = vunpack.c.h.b16 %v945
    %v1028 = vunpack.c.l.b16 %v946
    %v1029 = vunpack.c.h.b16 %v946
    %v1030 = vunpack.c.l.b16 %v947
    %v1031 = vunpack.c.h.b16 %v947
    %v1032 = vunpack.c.l.b16 %v948
    %v1033 = vunpack.c.h.b16 %v948
    %v1034 = vunpack.c.l.b16 %v949
    %v1035 = vunpack.c.h.b16 %v949
    %v1036 = vunpack.c.l.b16 %v950
    %v1037 = vunpack.c.h.b16 %v950
    %v1038 = vunpack.c.l.b16 %v951
    %v1039 = vunpack.c.h.b16 %v951
    %v1040 = vunpack.c.l.b16 %v952
    %v1041 = vunpack.c.h.b16 %v952
    %v1042 = vunpack.c.l.b16 %v953
    %v1043 = vunpack.c.h.b16 %v953
    %v1044 = vunpack.c.l.b16 %v954
    %v1045 = vunpack.c.h.b16 %v954
    %v1046 = vunpack.c.l.b16 %v955
    %v1047 = vunpack.c.h.b16 %v955
    %v1048 = vunpack.c.l.b16 %v956
    %v1049 = vunpack.c.h.b16 %v956
    %v1050 = vunpack.c.l.b16 %v957
    %v1051 = vunpack.c.h.b16 %v957
    %v1052 = vunpack.c.l.b16 %v958
    %v1053 = vunpack.c.h.b16 %v958
    %v1054 = vunpack.c.l.b16 %v959
    %v1055 = vunpack.c.h.b16 %v959
    %v1056 = vpack.c.b16 %v994, %v992
    %v1057 = vpack.c.b16 %v995, %v993
    %v1058 = vpack.c.b16 %v998, %v996
    %v1059 = vpack.c.b16 %v999, %v997
    %v1060 = vpack.c.b16 %v1002, %v1000
    %v1061 = vpack.c.b16 %v1003, %v1001
    %v1062 = vpack.c.b16 %v1006, %v1004
    %v1063 = vpack.c.b16 %v1007, %v1005
    %v1064 = vpack.c.b16 %v1010, %v1008
    %v1065 = vpack.c.b16 %v1011, %v1009
    %v1066 = vpack.c.b16 %v1014, %v1012
    %v1067 = vpack.c.b16 %v1015, %v1013
    %v1068 = vpack.c.b16 %v1018, %v1016
    %v1069 = vpack.c.b16 %v1019, %v1017
    %v1070 = vpack.c.b16 %v1022, %v1020
    %v1071 = vpack.c.b16 %v1023, %v1021
    %v1072 = vpack.c.b16 %v1026, %v1024
    %v1073 = vpack.c.b16 %v1027, %v1025
    %v1074 = vpack.c.b16 %v1030, %v1028
    %v1075 = vpack.c.b16 %v1031, %v1029
    %v1076 = vpack.c.b16 %v1034, %v1032
    %v1077 = vpack.c.b16 %v1035, %v1033
    %v1078 = vpack.c.b16 %v1038, %v1036
    %v1079 = vpack.c.b16 %v1039, %v1037
    %v1080 = vpack.c.b16 %v1042, %v1040
    %v1081 = vpack.c.b16 %v1043, %v1041
    %v1082 = vpack.c.b16 %v1046, %v1044
    %v1083 = vpack.c.b16 %v1047, %v1045
    %v1084 = vpack.c.b16 %v1050, %v1048
    %v1085 = vpack.c.b16 %v1051, %v1049
    %v1086 = vpack.c.b16 %v1054, %v1052
    %v1087 = vpack.c.b16 %v1055, %v1053
    %1120 = vmatprep.subr.bf16.mxu0 %v1057
    %1121 = vmatpush1.bf16.msra.mxu0 %v1056
    %1122 = vmatprep.subr.bf16.mxu0 %v1059
    %1123 = vmatpush1.bf16.msra.mxu0 %v1058
    %1124 = vmatprep.subr.bf16.mxu0 %v1061
    %1125 = vmatpush1.bf16.msra.mxu0 %v1060
    %1126 = vmatprep.subr.bf16.mxu0 %v1063
    %1127 = vmatpush1.bf16.msra.mxu0 %v1062
    %1128 = vmatprep.subr.bf16.mxu0 %v1065
    %1129 = vmatpush1.bf16.msra.mxu0 %v1064
    %1130 = vmatprep.subr.bf16.mxu0 %v1067
    %1131 = vmatpush1.bf16.msra.mxu0 %v1066
    %1132 = vmatprep.subr.bf16.mxu0 %v1069
    %1133 = vmatpush1.bf16.msra.mxu0 %v1068
    %1134 = vmatprep.subr.bf16.mxu0 %v1071
    %1135 = vmatpush1.bf16.msra.mxu0 %v1070
    %1136 = vmatprep.subr.bf16.mxu0 %v1073
    %1137 = vmatpush1.bf16.msra.mxu0 %v1072
    %1138 = vmatprep.subr.bf16.mxu0 %v1075
    %1139 = vmatpush1.bf16.msra.mxu0 %v1074
    %1140 = vmatprep.subr.bf16.mxu0 %v1077
    %1141 = vmatpush1.bf16.msra.mxu0 %v1076
    %1142 = vmatprep.subr.bf16.mxu0 %v1079
    %1143 = vmatpush1.bf16.msra.mxu0 %v1078
    %1144 = vmatprep.subr.bf16.mxu0 %v1081
    %1145 = vmatpush1.bf16.msra.mxu0 %v1080
    %1146 = vmatprep.subr.bf16.mxu0 %v1083
    %1147 = vmatpush1.bf16.msra.mxu0 %v1082
    %1148 = vmatprep.subr.bf16.mxu0 %v1085
    %1149 = vmatpush1.bf16.msra.mxu0 %v1084
    %1150 = vmatprep.subr.bf16.mxu0 %v1087
    %1151 = vmatpush1.bf16.msra.mxu0 %v1086
    %1152 = vmatprep.mubr.bf16.mxu0 %v926
    %1153 = vmatmul.mubr.bf16.gmra.mrb[0].mxu0 %v925
    %v1154 = vpop.f32.mrb[0].mxu0
    %v1155 = vadd.f32 0.0, %v1154
    %v1156 = vpop.f32.mrb[0].mxu0
    %v1157 = vadd.f32 0.0, %v1156
    %v1158 = vpop.f32.mrb[0].mxu0
    %v1159 = vpop.f32.mrb[0].mxu0
    %1160 = vdwg.mxu0
    %s1161 = scalar_lea.vmem %s2, 6
    %v1162 = vld [vmem:[%s1161] sm:$0x3]
    %v1163 = vpack.c.bf16 %v1155, %v1155
    %v1164 = vpack.c.bf16 %v1157, %v1157
    %v1167 = vunpack.c.l.s4 1966171168
    %v1168 = vunpack.c.0.s8 %v1167
    %v1169 = vlaneseq
    %v1170 = vshrl.u32 %v1169, 7
    %v1171 = vsub.s32 %v1168, %v1170
    %v1172 = vrot.slane %v1162, %v1171
    %v1173 = vcombine.high %v1172, %v1172
    %v1175 = vunpack.c.l.s4 1966171168
    %v1176 = vunpack.c.0.s8 %v1175
    %v1177 = vlaneseq
    %v1178 = vshrl.u32 %v1177, 7
    %v1179 = vsub.s32 %v1176, %v1178
    %v1180 = vrot.slane %v1172, %v1179
    %v1182 = vunpack.c.l.s4 1966171168
    %v1183 = vunpack.c.0.s8 %v1182
    %v1184 = vlaneseq
    %v1185 = vshrl.u32 %v1184, 7
    %v1186 = vsub.s32 %v1183, %v1185
    %v1187 = vrot.slane %v1173, %v1186
    %v1189 = vpack.i.b16 %v1180, %v1180
    %v1191 = vlaneseq
    %v1192 = vshrl.u32 %v1191, 7
    %v1193 = vsub.s32 0, %v1192
    %v1194 = vrot.slane %v1189, %v1193
    %v1196 = vpack.i.b16 %v1187, %v1187
    %v1198 = vlaneseq
    %v1199 = vshrl.u32 %v1198, 7
    %v1200 = vsub.s32 0, %v1199
    %v1201 = vrot.slane %v1196, %v1200
    %v1202 = vadd.bf16 %v1163, %v1194
    %v1203 = vadd.bf16 %v1164, %v1201
    %vm1204 = vcmp.gt.bf16.partialorder %v1202, 0
    %vm1205 = vcmp.gt.bf16.partialorder %v1203, 0
    %v1207 = vmul.bf16 %v1202, 1069105081
    %v1208 = vpow.bf16.pop %v1207
    %v1210 = vmul.bf16 %v1203, 1069105081
    %v1211 = vpow.bf16.pop %v1210
    %v1212 = vsub.bf16 %v1208, 1065369472
    %v1213 = vsub.bf16 %v1211, 1065369472
    %v1214 = vsel %vm1204, %v1202, %v1212
    %v1215 = vsel %vm1205, %v1203, %v1213
    %s1216 = scalar_lea.vmem [#allocation2], 1024
    %v1217 = vld [vmem:[%s1216] sm:$0xff]
    %v1218 = vld [vmem:[%s1216 + $0x8] sm:$0xff]
    %v1219 = vld [vmem:[%s1216 + $0x10] sm:$0xff]
    %v1220 = vld [vmem:[%s1216 + $0x18] sm:$0xff]
    %v1221 = vld [vmem:[%s1216 + $0x20] sm:$0xff]
    %v1222 = vld [vmem:[%s1216 + $0x28] sm:$0xff]
    %v1223 = vld [vmem:[%s1216 + $0x30] sm:$0xff]
    %v1224 = vld [vmem:[%s1216 + $0x38] sm:$0xff]
    %v1225 = vld [vmem:[%s1216 + $0x40] sm:$0xff]
    %v1226 = vld [vmem:[%s1216 + $0x48] sm:$0xff]
    %v1227 = vld [vmem:[%s1216 + $0x50] sm:$0xff]
    %v1228 = vld [vmem:[%s1216 + $0x58] sm:$0xff]
    %v1229 = vld [vmem:[%s1216 + $0x60] sm:$0xff]
    %v1230 = vld [vmem:[%s1216 + $0x68] sm:$0xff]
    %v1231 = vld [vmem:[%s1216 + $0x70] sm:$0xff]
    %v1232 = vld [vmem:[%s1216 + $0x78] sm:$0xff]
    %v1233 = vld [vmem:[%s1216 + $0x80] sm:$0xff]
    %v1234 = vld [vmem:[%s1216 + $0x88] sm:$0xff]
    %v1235 = vld [vmem:[%s1216 + $0x90] sm:$0xff]
    %v1236 = vld [vmem:[%s1216 + $0x98] sm:$0xff]
    %v1237 = vld [vmem:[%s1216 + $0xa0] sm:$0xff]
    %v1238 = vld [vmem:[%s1216 + $0xa8] sm:$0xff]
    %v1239 = vld [vmem:[%s1216 + $0xb0] sm:$0xff]
    %v1240 = vld [vmem:[%s1216 + $0xb8] sm:$0xff]
    %v1241 = vld [vmem:[%s1216 + $0xc0] sm:$0xff]
    %v1242 = vld [vmem:[%s1216 + $0xc8] sm:$0xff]
    %v1243 = vld [vmem:[%s1216 + $0xd0] sm:$0xff]
    %v1244 = vld [vmem:[%s1216 + $0xd8] sm:$0xff]
    %v1245 = vld [vmem:[%s1216 + $0xe0] sm:$0xff]
    %v1246 = vld [vmem:[%s1216 + $0xe8] sm:$0xff]
    %v1247 = vld [vmem:[%s1216 + $0xf0] sm:$0xff]
    %v1248 = vld [vmem:[%s1216 + $0xf8] sm:$0xff]
    %v1281 = vunpack.c.l.b16 %v1217
    %v1282 = vunpack.c.h.b16 %v1217
    %v1283 = vunpack.c.l.b16 %v1218
    %v1284 = vunpack.c.h.b16 %v1218
    %v1285 = vunpack.c.l.b16 %v1219
    %v1286 = vunpack.c.h.b16 %v1219
    %v1287 = vunpack.c.l.b16 %v1220
    %v1288 = vunpack.c.h.b16 %v1220
    %v1289 = vunpack.c.l.b16 %v1221
    %v1290 = vunpack.c.h.b16 %v1221
    %v1291 = vunpack.c.l.b16 %v1222
    %v1292 = vunpack.c.h.b16 %v1222
    %v1293 = vunpack.c.l.b16 %v1223
    %v1294 = vunpack.c.h.b16 %v1223
    %v1295 = vunpack.c.l.b16 %v1224
    %v1296 = vunpack.c.h.b16 %v1224
    %v1297 = vunpack.c.l.b16 %v1225
    %v1298 = vunpack.c.h.b16 %v1225
    %v1299 = vunpack.c.l.b16 %v1226
    %v1300 = vunpack.c.h.b16 %v1226
    %v1301 = vunpack.c.l.b16 %v1227
    %v1302 = vunpack.c.h.b16 %v1227
    %v1303 = vunpack.c.l.b16 %v1228
    %v1304 = vunpack.c.h.b16 %v1228
    %v1305 = vunpack.c.l.b16 %v1229
    %v1306 = vunpack.c.h.b16 %v1229
    %v1307 = vunpack.c.l.b16 %v1230
    %v1308 = vunpack.c.h.b16 %v1230
    %v1309 = vunpack.c.l.b16 %v1231
    %v1310 = vunpack.c.h.b16 %v1231
    %v1311 = vunpack.c.l.b16 %v1232
    %v1312 = vunpack.c.h.b16 %v1232
    %v1313 = vunpack.c.l.b16 %v1233
    %v1314 = vunpack.c.h.b16 %v1233
    %v1315 = vunpack.c.l.b16 %v1234
    %v1316 = vunpack.c.h.b16 %v1234
    %v1317 = vunpack.c.l.b16 %v1235
    %v1318 = vunpack.c.h.b16 %v1235
    %v1319 = vunpack.c.l.b16 %v1236
    %v1320 = vunpack.c.h.b16 %v1236
    %v1321 = vunpack.c.l.b16 %v1237
    %v1322 = vunpack.c.h.b16 %v1237
    %v1323 = vunpack.c.l.b16 %v1238
    %v1324 = vunpack.c.h.b16 %v1238
    %v1325 = vunpack.c.l.b16 %v1239
    %v1326 = vunpack.c.h.b16 %v1239
    %v1327 = vunpack.c.l.b16 %v1240
    %v1328 = vunpack.c.h.b16 %v1240
    %v1329 = vunpack.c.l.b16 %v1241
    %v1330 = vunpack.c.h.b16 %v1241
    %v1331 = vunpack.c.l.b16 %v1242
    %v1332 = vunpack.c.h.b16 %v1242
    %v1333 = vunpack.c.l.b16 %v1243
    %v1334 = vunpack.c.h.b16 %v1243
    %v1335 = vunpack.c.l.b16 %v1244
    %v1336 = vunpack.c.h.b16 %v1244
    %v1337 = vunpack.c.l.b16 %v1245
    %v1338 = vunpack.c.h.b16 %v1245
    %v1339 = vunpack.c.l.b16 %v1246
    %v1340 = vunpack.c.h.b16 %v1246
    %v1341 = vunpack.c.l.b16 %v1247
    %v1342 = vunpack.c.h.b16 %v1247
    %v1343 = vunpack.c.l.b16 %v1248
    %v1344 = vunpack.c.h.b16 %v1248
    %v1345 = vpack.c.b16 %v1283, %v1281
    %v1346 = vpack.c.b16 %v1284, %v1282
    %v1347 = vpack.c.b16 %v1287, %v1285
    %v1348 = vpack.c.b16 %v1288, %v1286
    %v1349 = vpack.c.b16 %v1291, %v1289
    %v1350 = vpack.c.b16 %v1292, %v1290
    %v1351 = vpack.c.b16 %v1295, %v1293
    %v1352 = vpack.c.b16 %v1296, %v1294
    %v1353 = vpack.c.b16 %v1299, %v1297
    %v1354 = vpack.c.b16 %v1300, %v1298
    %v1355 = vpack.c.b16 %v1303, %v1301
    %v1356 = vpack.c.b16 %v1304, %v1302
    %v1357 = vpack.c.b16 %v1307, %v1305
    %v1358 = vpack.c.b16 %v1308, %v1306
    %v1359 = vpack.c.b16 %v1311, %v1309
    %v1360 = vpack.c.b16 %v1312, %v1310
    %v1361 = vpack.c.b16 %v1315, %v1313
    %v1362 = vpack.c.b16 %v1316, %v1314
    %v1363 = vpack.c.b16 %v1319, %v1317
    %v1364 = vpack.c.b16 %v1320, %v1318
    %v1365 = vpack.c.b16 %v1323, %v1321
    %v1366 = vpack.c.b16 %v1324, %v1322
    %v1367 = vpack.c.b16 %v1327, %v1325
    %v1368 = vpack.c.b16 %v1328, %v1326
    %v1369 = vpack.c.b16 %v1331, %v1329
    %v1370 = vpack.c.b16 %v1332, %v1330
    %v1371 = vpack.c.b16 %v1335, %v1333
    %v1372 = vpack.c.b16 %v1336, %v1334
    %v1373 = vpack.c.b16 %v1339, %v1337
    %v1374 = vpack.c.b16 %v1340, %v1338
    %v1375 = vpack.c.b16 %v1343, %v1341
    %v1376 = vpack.c.b16 %v1344, %v1342
    %1409 = vmatprep.subr.bf16.mxu0 %v1346
    %1410 = vmatpush1.bf16.msra.mxu0 %v1345
    %1411 = vmatprep.subr.bf16.mxu0 %v1348
    %1412 = vmatpush1.bf16.msra.mxu0 %v1347
    %1413 = vmatprep.subr.bf16.mxu0 %v1350
    %1414 = vmatpush1.bf16.msra.mxu0 %v1349
    %1415 = vmatprep.subr.bf16.mxu0 %v1352
    %1416 = vmatpush1.bf16.msra.mxu0 %v1351
    %1417 = vmatprep.subr.bf16.mxu0 %v1354
    %1418 = vmatpush1.bf16.msra.mxu0 %v1353
    %1419 = vmatprep.subr.bf16.mxu0 %v1356
    %1420 = vmatpush1.bf16.msra.mxu0 %v1355
    %1421 = vmatprep.subr.bf16.mxu0 %v1358
    %1422 = vmatpush1.bf16.msra.mxu0 %v1357
    %1423 = vmatprep.subr.bf16.mxu0 %v1360
    %1424 = vmatpush1.bf16.msra.mxu0 %v1359
    %1425 = vmatprep.subr.bf16.mxu0 %v1362
    %1426 = vmatpush1.bf16.msra.mxu0 %v1361
    %1427 = vmatprep.subr.bf16.mxu0 %v1364
    %1428 = vmatpush1.bf16.msra.mxu0 %v1363
    %1429 = vmatprep.subr.bf16.mxu0 %v1366
    %1430 = vmatpush1.bf16.msra.mxu0 %v1365
    %1431 = vmatprep.subr.bf16.mxu0 %v1368
    %1432 = vmatpush1.bf16.msra.mxu0 %v1367
    %1433 = vmatprep.subr.bf16.mxu0 %v1370
    %1434 = vmatpush1.bf16.msra.mxu0 %v1369
    %1435 = vmatprep.subr.bf16.mxu0 %v1372
    %1436 = vmatpush1.bf16.msra.mxu0 %v1371
    %1437 = vmatprep.subr.bf16.mxu0 %v1374
    %1438 = vmatpush1.bf16.msra.mxu0 %v1373
    %1439 = vmatprep.subr.bf16.mxu0 %v1376
    %1440 = vmatpush1.bf16.msra.mxu0 %v1375
    %1441 = vmatprep.mubr.bf16.mxu0 %v1215
    %1442 = vmatmul.mubr.bf16.gmra.mrb[0].mxu0 %v1214
    %v1443 = vpop.f32.mrb[0].mxu0
    %v1444 = vadd.f32 0.0, %v1443
    %v1445 = vpop.f32.mrb[0].mxu0
    %v1446 = vadd.f32 0.0, %v1445
    %v1447 = vpop.f32.mrb[0].mxu0
    %v1448 = vpop.f32.mrb[0].mxu0
    %1449 = vdwg.mxu0
    %s1450 = scalar_lea.vmem %s2, 8
    %v1451 = vld [vmem:[%s1450] sm:$0x3]
    %v1452 = vpack.c.bf16 %v1444, %v1444
    %v1453 = vpack.c.bf16 %v1446, %v1446
    %v1456 = vunpack.c.l.s4 1966171168
    %v1457 = vunpack.c.0.s8 %v1456
    %v1458 = vlaneseq
    %v1459 = vshrl.u32 %v1458, 7
    %v1460 = vsub.s32 %v1457, %v1459
    %v1461 = vrot.slane %v1451, %v1460
    %v1462 = vcombine.high %v1461, %v1461
    %v1464 = vunpack.c.l.s4 1966171168
    %v1465 = vunpack.c.0.s8 %v1464
    %v1466 = vlaneseq
    %v1467 = vshrl.u32 %v1466, 7
    %v1468 = vsub.s32 %v1465, %v1467
    %v1469 = vrot.slane %v1461, %v1468
    %v1471 = vunpack.c.l.s4 1966171168
    %v1472 = vunpack.c.0.s8 %v1471
    %v1473 = vlaneseq
    %v1474 = vshrl.u32 %v1473, 7
    %v1475 = vsub.s32 %v1472, %v1474
    %v1476 = vrot.slane %v1462, %v1475
    %v1478 = vpack.i.b16 %v1469, %v1469
    %v1480 = vlaneseq
    %v1481 = vshrl.u32 %v1480, 7
    %v1482 = vsub.s32 0, %v1481
    %v1483 = vrot.slane %v1478, %v1482
    %v1485 = vpack.i.b16 %v1476, %v1476
    %v1487 = vlaneseq
    %v1488 = vshrl.u32 %v1487, 7
    %v1489 = vsub.s32 0, %v1488
    %v1490 = vrot.slane %v1485, %v1489
    %v1491 = vadd.bf16 %v1452, %v1483
    %v1492 = vadd.bf16 %v1453, %v1490
    %vm1493 = vcmp.gt.bf16.partialorder %v1491, 0
    %vm1494 = vcmp.gt.bf16.partialorder %v1492, 0
    %v1496 = vmul.bf16 %v1491, 1069105081
    %v1497 = vpow.bf16.pop %v1496
    %v1499 = vmul.bf16 %v1492, 1069105081
    %v1500 = vpow.bf16.pop %v1499
    %v1501 = vsub.bf16 %v1497, 1065369472
    %v1502 = vsub.bf16 %v1500, 1065369472
    %v1503 = vsel %vm1493, %v1491, %v1501
    %v1504 = vsel %vm1494, %v1492, %v1502
    %s1505 = scalar_lea.vmem [#allocation2], 1280
    %v1506 = vld [vmem:[%s1505] sm:$0xff]
    %v1507 = vld [vmem:[%s1505 + $0x8] sm:$0xff]
    %v1508 = vld [vmem:[%s1505 + $0x10] sm:$0xff]
    %v1509 = vld [vmem:[%s1505 + $0x18] sm:$0xff]
    %v1510 = vld [vmem:[%s1505 + $0x20] sm:$0xff]
    %v1511 = vld [vmem:[%s1505 + $0x28] sm:$0xff]
    %v1512 = vld [vmem:[%s1505 + $0x30] sm:$0xff]
    %v1513 = vld [vmem:[%s1505 + $0x38] sm:$0xff]
    %v1514 = vld [vmem:[%s1505 + $0x40] sm:$0xff]
    %v1515 = vld [vmem:[%s1505 + $0x48] sm:$0xff]
    %v1516 = vld [vmem:[%s1505 + $0x50] sm:$0xff]
    %v1517 = vld [vmem:[%s1505 + $0x58] sm:$0xff]
    %v1518 = vld [vmem:[%s1505 + $0x60] sm:$0xff]
    %v1519 = vld [vmem:[%s1505 + $0x68] sm:$0xff]
    %v1520 = vld [vmem:[%s1505 + $0x70] sm:$0xff]
    %v1521 = vld [vmem:[%s1505 + $0x78] sm:$0xff]
    %v1522 = vld [vmem:[%s1505 + $0x80] sm:$0xff]
    %v1523 = vld [vmem:[%s1505 + $0x88] sm:$0xff]
    %v1524 = vld [vmem:[%s1505 + $0x90] sm:$0xff]
    %v1525 = vld [vmem:[%s1505 + $0x98] sm:$0xff]
    %v1526 = vld [vmem:[%s1505 + $0xa0] sm:$0xff]
    %v1527 = vld [vmem:[%s1505 + $0xa8] sm:$0xff]
    %v1528 = vld [vmem:[%s1505 + $0xb0] sm:$0xff]
    %v1529 = vld [vmem:[%s1505 + $0xb8] sm:$0xff]
    %v1530 = vld [vmem:[%s1505 + $0xc0] sm:$0xff]
    %v1531 = vld [vmem:[%s1505 + $0xc8] sm:$0xff]
    %v1532 = vld [vmem:[%s1505 + $0xd0] sm:$0xff]
    %v1533 = vld [vmem:[%s1505 + $0xd8] sm:$0xff]
    %v1534 = vld [vmem:[%s1505 + $0xe0] sm:$0xff]
    %v1535 = vld [vmem:[%s1505 + $0xe8] sm:$0xff]
    %v1536 = vld [vmem:[%s1505 + $0xf0] sm:$0xff]
    %v1537 = vld [vmem:[%s1505 + $0xf8] sm:$0xff]
    %v1570 = vunpack.c.l.b16 %v1506
    %v1571 = vunpack.c.h.b16 %v1506
    %v1572 = vunpack.c.l.b16 %v1507
    %v1573 = vunpack.c.h.b16 %v1507
    %v1574 = vunpack.c.l.b16 %v1508
    %v1575 = vunpack.c.h.b16 %v1508
    %v1576 = vunpack.c.l.b16 %v1509
    %v1577 = vunpack.c.h.b16 %v1509
    %v1578 = vunpack.c.l.b16 %v1510
    %v1579 = vunpack.c.h.b16 %v1510
    %v1580 = vunpack.c.l.b16 %v1511
    %v1581 = vunpack.c.h.b16 %v1511
    %v1582 = vunpack.c.l.b16 %v1512
    %v1583 = vunpack.c.h.b16 %v1512
    %v1584 = vunpack.c.l.b16 %v1513
    %v1585 = vunpack.c.h.b16 %v1513
    %v1586 = vunpack.c.l.b16 %v1514
    %v1587 = vunpack.c.h.b16 %v1514
    %v1588 = vunpack.c.l.b16 %v1515
    %v1589 = vunpack.c.h.b16 %v1515
    %v1590 = vunpack.c.l.b16 %v1516
    %v1591 = vunpack.c.h.b16 %v1516
    %v1592 = vunpack.c.l.b16 %v1517
    %v1593 = vunpack.c.h.b16 %v1517
    %v1594 = vunpack.c.l.b16 %v1518
    %v1595 = vunpack.c.h.b16 %v1518
    %v1596 = vunpack.c.l.b16 %v1519
    %v1597 = vunpack.c.h.b16 %v1519
    %v1598 = vunpack.c.l.b16 %v1520
    %v1599 = vunpack.c.h.b16 %v1520
    %v1600 = vunpack.c.l.b16 %v1521
    %v1601 = vunpack.c.h.b16 %v1521
    %v1602 = vunpack.c.l.b16 %v1522
    %v1603 = vunpack.c.h.b16 %v1522
    %v1604 = vunpack.c.l.b16 %v1523
    %v1605 = vunpack.c.h.b16 %v1523
    %v1606 = vunpack.c.l.b16 %v1524
    %v1607 = vunpack.c.h.b16 %v1524
    %v1608 = vunpack.c.l.b16 %v1525
    %v1609 = vunpack.c.h.b16 %v1525
    %v1610 = vunpack.c.l.b16 %v1526
    %v1611 = vunpack.c.h.b16 %v1526
    %v1612 = vunpack.c.l.b16 %v1527
    %v1613 = vunpack.c.h.b16 %v1527
    %v1614 = vunpack.c.l.b16 %v1528
    %v1615 = vunpack.c.h.b16 %v1528
    %v1616 = vunpack.c.l.b16 %v1529
    %v1617 = vunpack.c.h.b16 %v1529
    %v1618 = vunpack.c.l.b16 %v1530
    %v1619 = vunpack.c.h.b16 %v1530
    %v1620 = vunpack.c.l.b16 %v1531
    %v1621 = vunpack.c.h.b16 %v1531
    %v1622 = vunpack.c.l.b16 %v1532
    %v1623 = vunpack.c.h.b16 %v1532
    %v1624 = vunpack.c.l.b16 %v1533
    %v1625 = vunpack.c.h.b16 %v1533
    %v1626 = vunpack.c.l.b16 %v1534
    %v1627 = vunpack.c.h.b16 %v1534
    %v1628 = vunpack.c.l.b16 %v1535
    %v1629 = vunpack.c.h.b16 %v1535
    %v1630 = vunpack.c.l.b16 %v1536
    %v1631 = vunpack.c.h.b16 %v1536
    %v1632 = vunpack.c.l.b16 %v1537
    %v1633 = vunpack.c.h.b16 %v1537
    %v1634 = vpack.c.b16 %v1572, %v1570
    %v1635 = vpack.c.b16 %v1573, %v1571
    %v1636 = vpack.c.b16 %v1576, %v1574
    %v1637 = vpack.c.b16 %v1577, %v1575
    %v1638 = vpack.c.b16 %v1580, %v1578
    %v1639 = vpack.c.b16 %v1581, %v1579
    %v1640 = vpack.c.b16 %v1584, %v1582
    %v1641 = vpack.c.b16 %v1585, %v1583
    %v1642 = vpack.c.b16 %v1588, %v1586
    %v1643 = vpack.c.b16 %v1589, %v1587
    %v1644 = vpack.c.b16 %v1592, %v1590
    %v1645 = vpack.c.b16 %v1593, %v1591
    %v1646 = vpack.c.b16 %v1596, %v1594
    %v1647 = vpack.c.b16 %v1597, %v1595
    %v1648 = vpack.c.b16 %v1600, %v1598
    %v1649 = vpack.c.b16 %v1601, %v1599
    %v1650 = vpack.c.b16 %v1604, %v1602
    %v1651 = vpack.c.b16 %v1605, %v1603
    %v1652 = vpack.c.b16 %v1608, %v1606
    %v1653 = vpack.c.b16 %v1609, %v1607
    %v1654 = vpack.c.b16 %v1612, %v1610
    %v1655 = vpack.c.b16 %v1613, %v1611
    %v1656 = vpack.c.b16 %v1616, %v1614
    %v1657 = vpack.c.b16 %v1617, %v1615
    %v1658 = vpack.c.b16 %v1620, %v1618
    %v1659 = vpack.c.b16 %v1621, %v1619
    %v1660 = vpack.c.b16 %v1624, %v1622
    %v1661 = vpack.c.b16 %v1625, %v1623
    %v1662 = vpack.c.b16 %v1628, %v1626
    %v1663 = vpack.c.b16 %v1629, %v1627
    %v1664 = vpack.c.b16 %v1632, %v1630
    %v1665 = vpack.c.b16 %v1633, %v1631
    %1698 = vmatprep.subr.bf16.mxu0 %v1635
    %1699 = vmatpush1.bf16.msra.mxu0 %v1634
    %1700 = vmatprep.subr.bf16.mxu0 %v1637
    %1701 = vmatpush1.bf16.msra.mxu0 %v1636
    %1702 = vmatprep.subr.bf16.mxu0 %v1639
    %1703 = vmatpush1.bf16.msra.mxu0 %v1638
    %1704 = vmatprep.subr.bf16.mxu0 %v1641
    %1705 = vmatpush1.bf16.msra.mxu0 %v1640
    %1706 = vmatprep.subr.bf16.mxu0 %v1643
    %1707 = vmatpush1.bf16.msra.mxu0 %v1642
    %1708 = vmatprep.subr.bf16.mxu0 %v1645
    %1709 = vmatpush1.bf16.msra.mxu0 %v1644
    %1710 = vmatprep.subr.bf16.mxu0 %v1647
    %1711 = vmatpush1.bf16.msra.mxu0 %v1646
    %1712 = vmatprep.subr.bf16.mxu0 %v1649
    %1713 = vmatpush1.bf16.msra.mxu0 %v1648
    %1714 = vmatprep.subr.bf16.mxu0 %v1651
    %1715 = vmatpush1.bf16.msra.mxu0 %v1650
    %1716 = vmatprep.subr.bf16.mxu0 %v1653
    %1717 = vmatpush1.bf16.msra.mxu0 %v1652
    %1718 = vmatprep.subr.bf16.mxu0 %v1655
    %1719 = vmatpush1.bf16.msra.mxu0 %v1654
    %1720 = vmatprep.subr.bf16.mxu0 %v1657
    %1721 = vmatpush1.bf16.msra.mxu0 %v1656
    %1722 = vmatprep.subr.bf16.mxu0 %v1659
    %1723 = vmatpush1.bf16.msra.mxu0 %v1658
    %1724 = vmatprep.subr.bf16.mxu0 %v1661
    %1725 = vmatpush1.bf16.msra.mxu0 %v1660
    %1726 = vmatprep.subr.bf16.mxu0 %v1663
    %1727 = vmatpush1.bf16.msra.mxu0 %v1662
    %1728 = vmatprep.subr.bf16.mxu0 %v1665
    %1729 = vmatpush1.bf16.msra.mxu0 %v1664
    %1730 = vmatprep.mubr.bf16.mxu0 %v1504
    %1731 = vmatmul.mubr.bf16.gmra.mrb[0].mxu0 %v1503
    %v1732 = vpop.f32.mrb[0].mxu0
    %v1733 = vadd.f32 0.0, %v1732
    %v1734 = vpop.f32.mrb[0].mxu0
    %v1735 = vadd.f32 0.0, %v1734
    %v1736 = vpop.f32.mrb[0].mxu0
    %v1737 = vpop.f32.mrb[0].mxu0
    %1738 = vdwg.mxu0
    %s1739 = scalar_lea.vmem %s2, 10
    %v1740 = vld [vmem:[%s1739] sm:$0x3]
    %v1741 = vpack.c.bf16 %v1733, %v1733
    %v1742 = vpack.c.bf16 %v1735, %v1735
    %v1745 = vunpack.c.l.s4 1966171168
    %v1746 = vunpack.c.0.s8 %v1745
    %v1747 = vlaneseq
    %v1748 = vshrl.u32 %v1747, 7
    %v1749 = vsub.s32 %v1746, %v1748
    %v1750 = vrot.slane %v1740, %v1749
    %v1751 = vcombine.high %v1750, %v1750
    %v1753 = vunpack.c.l.s4 1966171168
    %v1754 = vunpack.c.0.s8 %v1753
    %v1755 = vlaneseq
    %v1756 = vshrl.u32 %v1755, 7
    %v1757 = vsub.s32 %v1754, %v1756
    %v1758 = vrot.slane %v1750, %v1757
    %v1760 = vunpack.c.l.s4 1966171168
    %v1761 = vunpack.c.0.s8 %v1760
    %v1762 = vlaneseq
    %v1763 = vshrl.u32 %v1762, 7
    %v1764 = vsub.s32 %v1761, %v1763
    %v1765 = vrot.slane %v1751, %v1764
    %v1767 = vpack.i.b16 %v1758, %v1758
    %v1769 = vlaneseq
    %v1770 = vshrl.u32 %v1769, 7
    %v1771 = vsub.s32 0, %v1770
    %v1772 = vrot.slane %v1767, %v1771
    %v1774 = vpack.i.b16 %v1765, %v1765
    %v1776 = vlaneseq
    %v1777 = vshrl.u32 %v1776, 7
    %v1778 = vsub.s32 0, %v1777
    %v1779 = vrot.slane %v1774, %v1778
    %v1780 = vadd.bf16 %v1741, %v1772
    %v1781 = vadd.bf16 %v1742, %v1779
    %vm1782 = vcmp.gt.bf16.partialorder %v1780, 0
    %vm1783 = vcmp.gt.bf16.partialorder %v1781, 0
    %v1785 = vmul.bf16 %v1780, 1069105081
    %v1786 = vpow.bf16.pop %v1785
    %v1788 = vmul.bf16 %v1781, 1069105081
    %v1789 = vpow.bf16.pop %v1788
    %v1790 = vsub.bf16 %v1786, 1065369472
    %v1791 = vsub.bf16 %v1789, 1065369472
    %v1792 = vsel %vm1782, %v1780, %v1790
    %v1793 = vsel %vm1783, %v1781, %v1791
    %v1794 = vld [vmem:[#allocation4] sm:$0xf]
    %v1795 = vld [vmem:[#allocation4 + $0x4] sm:$0xf]
    %v1796 = vld [vmem:[#allocation4 + $0x8] sm:$0xf]
    %v1797 = vld [vmem:[#allocation4 + $0xc] sm:$0xf]
    %v1798 = vld [vmem:[#allocation4 + $0x10] sm:$0xf]
    %v1799 = vld [vmem:[#allocation4 + $0x14] sm:$0xf]
    %v1800 = vld [vmem:[#allocation4 + $0x18] sm:$0xf]
    %v1801 = vld [vmem:[#allocation4 + $0x1c] sm:$0xf]
    %v1802 = vld [vmem:[#allocation4 + $0x20] sm:$0xf]
    %v1803 = vld [vmem:[#allocation4 + $0x24] sm:$0xf]
    %v1804 = vld [vmem:[#allocation4 + $0x28] sm:$0xf]
    %v1805 = vld [vmem:[#allocation4 + $0x2c] sm:$0xf]
    %v1806 = vld [vmem:[#allocation4 + $0x30] sm:$0xf]
    %v1807 = vld [vmem:[#allocation4 + $0x34] sm:$0xf]
    %v1808 = vld [vmem:[#allocation4 + $0x38] sm:$0xf]
    %v1809 = vld [vmem:[#allocation4 + $0x3c] sm:$0xf]
    %v1810 = vld [vmem:[#allocation4 + $0x40] sm:$0xf]
    %v1811 = vld [vmem:[#allocation4 + $0x44] sm:$0xf]
    %v1812 = vld [vmem:[#allocation4 + $0x48] sm:$0xf]
    %v1813 = vld [vmem:[#allocation4 + $0x4c] sm:$0xf]
    %v1814 = vld [vmem:[#allocation4 + $0x50] sm:$0xf]
    %v1815 = vld [vmem:[#allocation4 + $0x54] sm:$0xf]
    %v1816 = vld [vmem:[#allocation4 + $0x58] sm:$0xf]
    %v1817 = vld [vmem:[#allocation4 + $0x5c] sm:$0xf]
    %v1818 = vld [vmem:[#allocation4 + $0x60] sm:$0xf]
    %v1819 = vld [vmem:[#allocation4 + $0x64] sm:$0xf]
    %v1820 = vld [vmem:[#allocation4 + $0x68] sm:$0xf]
    %v1821 = vld [vmem:[#allocation4 + $0x6c] sm:$0xf]
    %v1822 = vld [vmem:[#allocation4 + $0x70] sm:$0xf]
    %v1823 = vld [vmem:[#allocation4 + $0x74] sm:$0xf]
    %v1824 = vld [vmem:[#allocation4 + $0x78] sm:$0xf]
    %v1825 = vld [vmem:[#allocation4 + $0x7c] sm:$0xf]
    %v1858 = vunpack.c.l.b16 %v1794
    %v1859 = vunpack.c.l.b16 %v1795
    %v1860 = vunpack.c.l.b16 %v1796
    %v1861 = vunpack.c.l.b16 %v1797
    %v1862 = vunpack.c.l.b16 %v1798
    %v1863 = vunpack.c.l.b16 %v1799
    %v1864 = vunpack.c.l.b16 %v1800
    %v1865 = vunpack.c.l.b16 %v1801
    %v1866 = vunpack.c.l.b16 %v1802
    %v1867 = vunpack.c.l.b16 %v1803
    %v1868 = vunpack.c.l.b16 %v1804
    %v1869 = vunpack.c.l.b16 %v1805
    %v1870 = vunpack.c.l.b16 %v1806
    %v1871 = vunpack.c.l.b16 %v1807
    %v1872 = vunpack.c.l.b16 %v1808
    %v1873 = vunpack.c.l.b16 %v1809
    %v1874 = vunpack.c.l.b16 %v1810
    %v1875 = vunpack.c.l.b16 %v1811
    %v1876 = vunpack.c.l.b16 %v1812
    %v1877 = vunpack.c.l.b16 %v1813
    %v1878 = vunpack.c.l.b16 %v1814
    %v1879 = vunpack.c.l.b16 %v1815
    %v1880 = vunpack.c.l.b16 %v1816
    %v1881 = vunpack.c.l.b16 %v1817
    %v1882 = vunpack.c.l.b16 %v1818
    %v1883 = vunpack.c.l.b16 %v1819
    %v1884 = vunpack.c.l.b16 %v1820
    %v1885 = vunpack.c.l.b16 %v1821
    %v1886 = vunpack.c.l.b16 %v1822
    %v1887 = vunpack.c.l.b16 %v1823
    %v1888 = vunpack.c.l.b16 %v1824
    %v1889 = vunpack.c.l.b16 %v1825
    %v1890 = vpack.c.b16 %v1859, %v1858
    %v1891 = vpack.c.b16 %v1861, %v1860
    %v1892 = vpack.c.b16 %v1863, %v1862
    %v1893 = vpack.c.b16 %v1865, %v1864
    %v1894 = vpack.c.b16 %v1867, %v1866
    %v1895 = vpack.c.b16 %v1869, %v1868
    %v1896 = vpack.c.b16 %v1871, %v1870
    %v1897 = vpack.c.b16 %v1873, %v1872
    %v1898 = vpack.c.b16 %v1875, %v1874
    %v1899 = vpack.c.b16 %v1877, %v1876
    %v1900 = vpack.c.b16 %v1879, %v1878
    %v1901 = vpack.c.b16 %v1881, %v1880
    %v1902 = vpack.c.b16 %v1883, %v1882
    %v1903 = vpack.c.b16 %v1885, %v1884
    %v1904 = vpack.c.b16 %v1887, %v1886
    %v1905 = vpack.c.b16 %v1889, %v1888
    %1922 = vmatprep.subr.bf16.mxu0 0
    %1923 = vmatpush1.bf16.msra.mxu0 %v1890
    %1924 = vmatprep.subr.bf16.mxu0 0
    %1925 = vmatpush1.bf16.msra.mxu0 %v1891
    %1926 = vmatprep.subr.bf16.mxu0 0
    %1927 = vmatpush1.bf16.msra.mxu0 %v1892
    %1928 = vmatprep.subr.bf16.mxu0 0
    %1929 = vmatpush1.bf16.msra.mxu0 %v1893
    %1930 = vmatprep.subr.bf16.mxu0 0
    %1931 = vmatpush1.bf16.msra.mxu0 %v1894
    %1932 = vmatprep.subr.bf16.mxu0 0
    %1933 = vmatpush1.bf16.msra.mxu0 %v1895
    %1934 = vmatprep.subr.bf16.mxu0 0
    %1935 = vmatpush1.bf16.msra.mxu0 %v1896
    %1936 = vmatprep.subr.bf16.mxu0 0
    %1937 = vmatpush1.bf16.msra.mxu0 %v1897
    %1938 = vmatprep.subr.bf16.mxu0 0
    %1939 = vmatpush1.bf16.msra.mxu0 %v1898
    %1940 = vmatprep.subr.bf16.mxu0 0
    %1941 = vmatpush1.bf16.msra.mxu0 %v1899
    %1942 = vmatprep.subr.bf16.mxu0 0
    %1943 = vmatpush1.bf16.msra.mxu0 %v1900
    %1944 = vmatprep.subr.bf16.mxu0 0
    %1945 = vmatpush1.bf16.msra.mxu0 %v1901
    %1946 = vmatprep.subr.bf16.mxu0 0
    %1947 = vmatpush1.bf16.msra.mxu0 %v1902
    %1948 = vmatprep.subr.bf16.mxu0 0
    %1949 = vmatpush1.bf16.msra.mxu0 %v1903
    %1950 = vmatprep.subr.bf16.mxu0 0
    %1951 = vmatpush1.bf16.msra.mxu0 %v1904
    %1952 = vmatprep.subr.bf16.mxu0 0
    %1953 = vmatpush1.bf16.msra.mxu0 %v1905
    %1954 = vmatprep.mubr.bf16.mxu0 %v1793
    %1955 = vmatmul.mubr.bf16.gmra.mrb[0].mxu0 %v1792
    %v1956 = vpop.f32.mrb[0].mxu0
    %v1957 = vadd.f32 0.0, %v1956
    %v1958 = vpop.f32.mrb[0].mxu0
    %v1959 = vpop.f32.mrb[0].mxu0
    %v1960 = vpop.f32.mrb[0].mxu0
    %1961 = vdwg.mxu0
    %v1962 = vld [vmem:[%s4] sm:$0x1]
    %v1963 = vpack.c.bf16 %v1957, %v1957
    %v1965 = vpack.i.b16 %v1962, %v1962
    %v1967 = vlaneseq
    %v1968 = vshrl.u32 %v1967, 7
    %v1969 = vsub.s32 0, %v1968
    %v1970 = vrot.slane %v1965, %v1969
    %v1971 = vadd.bf16 %v1963, %v1970
    %vm1972 = vcmp.gt.bf16.partialorder %v1971, 0
    %v1974 = vmul.bf16 %v1971, 1069105081
    %v1975 = vpow.bf16.pop %v1974
    %v1976 = vsub.bf16 %v1975, 1065369472
    %v1977 = vsel %vm1972, %v1971, %v1976
    %1978 = vst [vmem:[%s5] sm:$0x3] %v1977
    // Predicated region
    $region30: #{merge_model_forward.1} parent=1 // pred_check
      _
    $region31: #{merge_model_forward.1} parent=1 // pred_check_branch
      %1980 = sbr.rel (0) target = $region33
    $region32: #{merge_model_forward.1} parent=1 // pred_region
      _
    $region33: #{merge_model_forward.1} parent=1 // pred_fallthru
      _
    // Predicated region
    $region34: #{merge_model_forward.1} parent=1 // pred_check
      _
    $region35: #{merge_model_forward.1} parent=1 // pred_check_branch
      %1982 = sbr.rel (0) target = $region37
    $region36: #{merge_model_forward.1} parent=1 // pred_region
      _
    $region37: #{merge_model_forward.1} parent=1 // pred_fallthru
      _
    %1983 = vsyncpa [#allocation3], 1
    %1984 = vsyncpa [#allocation5], 1

</llo_original>
